<compile_context>
chip_gen: v7x
topology: tpu7x:2x2x1
jax: 0.10.0
libtpu: 0.0.40
codegen_flags: <defaults>
</compile_context>

<pallas_src>
import functools
import warnings
from typing import Iterable, Optional, Tuple

import jax
import jax.numpy as jnp
from jax.experimental import pallas as pl
from jax.experimental.pallas import tpu as pltpu


_COS_EPS = 1e-8            # torch.nn.functional.cosine_similarity eps
_LANES = 128
_MAX_TILE_ROWS = 8192      # sanity cap on (packed) rows per grid step


def _round_up(x: int, m: int) -> int:
    return ((x + m - 1) // m) * m


def _tpu_layout() -> Tuple[int, int]:
    """(TensorCores to split over, scoped-VMEM limit bytes) - conservative defaults."""
    try:
        kind = jax.devices()[0].device_kind.lower()
    except Exception:  # pragma: no cover - CPU/interpret fallback
        kind = ""
    num_cores = 2 if "v7" in kind else 1                      # v7x: 2 TCs / chip
    big_vmem = any(t in kind for t in ("v4", "v5", "v6"))     # 128 MiB VMEM parts
    vmem_limit = (64 if big_vmem else 32) * 1024 * 1024       # 32 MiB safe on v7x
    return num_cores, vmem_limit


def _choose_tile_rows(n_rows: int, lanes: int, itemsize: int, work_budget: int) -> int:
    # Lane-padding-aware per-row VMEM estimate:
    #   * 2 inputs x 2 pipeline buffers at native dtype (lane-padded width)
    #   * ~6 live f32 intermediates of input width (upcasts + products feeding MXU)
    #   * ~6 live f32 intermediates of the 128-lane epilogue (matmul outputs, term)
    per_row = 2 * 2 * lanes * itemsize + 6 * lanes * 4 + 6 * _LANES * 4
    tr = int(work_budget) // max(per_row, 1)
    tr = max(8, min((tr // 8) * 8, _MAX_TILE_ROWS))
    return min(tr, _round_up(n_rows, 8))


def _orth_kernel(epsilon, n_valid_rows, tile_rows, blocks_per_core,
                 a_ref, b_ref, s_ref, out_ref, acc_ref):
    c = pl.program_id(0)            # TensorCore split axis ("parallel")
    j = pl.program_id(1)            # streaming / reduction axis ("arbitrary")

    @pl.when(j == 0)
    def _init():
        acc_ref[...] = jnp.zeros_like(acc_ref)

    a = a_ref[...].astype(jnp.float32)                 # (tile_rows, lanes)
    b = b_ref[...].astype(jnp.float32)
    s = s_ref[...]                                     # (lanes, 128) 0/1 reduce matrix

    # Row reductions on the (otherwise idle) MXU instead of the XLU.
    dot = jnp.dot(a * b, s, preferred_element_type=jnp.float32,
                  precision=jax.lax.Precision.HIGHEST)          # (tile_rows, 128)
    na2 = jnp.dot(a * a, s, preferred_element_type=jnp.float32,
                  precision=jax.lax.Precision.HIGHEST)
    nb2 = jnp.dot(b * b, s, preferred_element_type=jnp.float32,
                  precision=jax.lax.Precision.HIGHEST)

    # cos^2 with no sqrt and no norm; matches torch's per-norm clamp because
    # max(sqrt(x), eps) == sqrt(max(x, eps^2)).
    c2 = _COS_EPS * _COS_EPS
    denom = jnp.maximum(na2, c2) * jnp.maximum(nb2, c2)
    cos2 = (dot * dot) / denom
    term = jnp.maximum(cos2 - epsilon, 0.0)            # lane-dense (tile_rows, 128)

    blk = c * blocks_per_core + j                      # unclamped global block id
    base = blk * tile_rows
    needs_mask = base + tile_rows > n_valid_rows       # partial or duplicated tail

    def _accumulate(t):
        # Reduce the tile to one (8, 128) vreg with pure VPU adds; the single
        # cross-lane / cross-sublane reduction happens only once, in the wrapper.
        acc_ref[...] += jnp.sum(t.reshape(-1, 8, _LANES), axis=0)

    @pl.when(jnp.logical_not(needs_mask))
    def _full():
        _accumulate(term)

    @pl.when(needs_mask)
    def _tail():
        row = base + jax.lax.broadcasted_iota(jnp.int32, term.shape, 0)
        _accumulate(jnp.where(row < n_valid_rows, term, 0.0))

    @pl.when(j == pl.num_programs(1) - 1)
    def _finalize():
        out_ref[...] = acc_ref[...]


def orthogonality_term(a: jax.Array, b: jax.Array, *, epsilon: float = 1e-5,
                       tile_rows: Optional[int] = None) -> jax.Array:
    """sum(relu(cosine_similarity(a, b, dim=-1)**2 - epsilon)) as a Pallas TPU kernel."""
    if a.shape != b.shape:
        a, b = jnp.broadcast_arrays(a, b)
    d = a.shape[-1]
    a2 = jnp.reshape(a, (-1, d))
    b2 = jnp.reshape(b, (-1, d))
    n = a2.shape[0]
    itemsize = jnp.dtype(a2.dtype).itemsize

    if d <= _LANES and _LANES % d == 0:
        # Lane-dense repack: (N, d) -> (N*d/128, 128) is a free reshape of
        # contiguous HBM. Each 128-lane row holds `pack` original rows; a 0/1
        # block-diagonal matrix computes per-segment (= per original row) sums
        # on the MXU, and every lane of a segment ends up holding its row term.
        pack = _LANES // d
        if n % pack:
            # TODO(synk): tiny concat copy, only when N is not a multiple of 128/d;
            # zero rows contribute exactly 0 to the regularization term.
            pad = pack - n % pack
            a2 = jnp.concatenate([a2, jnp.zeros((pad, d), a2.dtype)], axis=0)
            b2 = jnp.concatenate([b2, jnp.zeros((pad, d), b2.dtype)], axis=0)
        n_rows = a2.shape[0] // pack
        a2 = jnp.reshape(a2, (n_rows, _LANES))
        b2 = jnp.reshape(b2, (n_rows, _LANES))
        lanes = _LANES
        divisor = d                                    # term replicated d times / row
        lane = jnp.arange(_LANES, dtype=jnp.int32)
        smat = (lane[:, None] // d == lane[None, :] // d).astype(jnp.float32)
    else:
        lanes = _round_up(d, _LANES)
        if lanes != d:
            # TODO(synk): lane-dim zero pad (one HBM copy) only for dims that are
            # neither a divisor nor a multiple of 128; zero lanes add nothing.
            a2 = jnp.pad(a2, ((0, 0), (0, lanes - d)))
            b2 = jnp.pad(b2, ((0, 0), (0, lanes - d)))
        n_rows = n
        divisor = _LANES                               # ones matrix replicates 128x
        smat = jnp.ones((lanes, _LANES), jnp.float32)

    num_cores, vmem_limit = _tpu_layout()
    if tile_rows is None:
        tile_rows = _choose_tile_rows(n_rows, lanes, itemsize, (3 * vmem_limit) // 5)
    tile_rows = min(max(8, (int(tile_rows) // 8) * 8), _round_up(n_rows, 8))

    n_blocks = pl.cdiv(n_rows, tile_rows)
    num_splits = num_cores if (num_cores > 1 and n_blocks >= 2) else 1
    blocks_per_core = pl.cdiv(n_blocks, num_splits)

    if num_splits == 1:
        def in_map(c, j):
            return (j, 0)
    else:
        def in_map(c, j):
            # Clamp so the second core's tail never reads out of range; the
            # kernel masks the duplicated rows via the unclamped block id.
            return (jnp.minimum(c * blocks_per_core + j, n_blocks - 1), 0)

    kernel = functools.partial(_orth_kernel, float(epsilon), int(n_rows),
                               int(tile_rows), int(blocks_per_core))

    out = pl.pallas_call(
        kernel,
        out_shape=jax.ShapeDtypeStruct((num_splits * 8, _LANES), jnp.float32),
        grid=(num_splits, blocks_per_core),
        in_specs=[
            pl.BlockSpec((tile_rows, lanes), in_map),
            pl.BlockSpec((tile_rows, lanes), in_map),
            pl.BlockSpec(smat.shape, lambda c, j: (0, 0)),
        ],
        out_specs=pl.BlockSpec((8, _LANES), lambda c, j: (c, 0)),
        scratch_shapes=[pltpu.VMEM((8, _LANES), jnp.float32)],
        compiler_params=pltpu.CompilerParams(
            dimension_semantics=("parallel", "arbitrary"),
            vmem_limit_bytes=vmem_limit,
        ),
        cost_estimate=pl.CostEstimate(
            flops=int(n_rows) * lanes * (6 + 6 * _LANES),
            transcendentals=0,
            bytes_accessed=2 * int(n_rows) * lanes * itemsize,
        ),
    )(a2, b2, smat)

    # Each valid row's term is replicated `divisor` times across its lanes.
    return jnp.sum(out) / float(divisor)


class Regularizer:
    """JAX/Pallas port of pykeen's Regularizer bookkeeping."""

    def __init__(
        self,
        weight: float = 1.0,
        apply_only_once: bool = False,
        parameters: Optional[Iterable[jax.Array]] = None,
    ):
        self.tracked_parameters = list(parameters) if parameters else []
        self.weight = jnp.asarray(weight, dtype=jnp.float32)
        self.apply_only_once = apply_only_once
        self.regularization_term = jnp.zeros((1,), dtype=jnp.float32)
        self.updated = False
        self.training = True
        self.reset()

    def add_parameter(self, parameter: jax.Array) -> None:
        self.tracked_parameters.append(parameter)

    def reset(self) -> None:
        self.regularization_term = jnp.zeros((1,), dtype=jnp.float32)
        self.updated = False

    def forward(self, x: jax.Array) -> jax.Array:
        raise NotImplementedError  # abstract in the base class

    def update(self, *tensors: jax.Array) -> None:
        # TODO(synk): torch.is_grad_enabled() has no direct JAX analogue; treated as True.
        if not self.training or (self.apply_only_once and self.updated):
            return
        self.regularization_term = self.regularization_term + sum(
            self.forward(x) for x in tensors)
        self.updated = True

    @property
    def term(self) -> jax.Array:
        return self.regularization_term * self.weight

    def pop_regularization_term(self) -> jax.Array:
        if self.tracked_parameters:
            self.update(*self.tracked_parameters)
        result = self.weight * self.regularization_term
        self.reset()
        return result

    def post_parameter_update(self) -> None:
        if self.updated:
            warnings.warn(
                "Resetting regularization term without using it; this may be an error.")
        self.reset()


class OrthogonalityRegularizer(Regularizer):
    """Soft orthogonality constraint: relu(cos_sim(w, d, dim=-1)^2 - eps).sum()."""

    def __init__(self, *, weight: float = 1.0, apply_only_once: bool = True,
                 epsilon: float = 1e-5, **kwargs):
        super().__init__(weight=weight, apply_only_once=apply_only_once, **kwargs)
        self.epsilon = float(epsilon)

    def forward(self, x: jax.Array) -> jax.Array:
        raise NotImplementedError(
            f"{self.__class__.__name__} regularizer is order-sensitive!")

    def update(self, *tensors: jax.Array) -> None:
        if len(tensors) != 2:
            raise ValueError("Expects exactly two tensors")
        if self.apply_only_once and self.updated:
            return
        self.regularization_term = self.regularization_term + orthogonality_term(
            tensors[0], tensors[1], epsilon=self.epsilon)
        self.updated = True


def _ref_term(a, b, eps):
    a2 = jnp.reshape(a, (-1, a.shape[-1])).astype(jnp.float32)
    b2 = jnp.reshape(b, (-1, b.shape[-1])).astype(jnp.float32)
    na = jnp.maximum(jnp.sqrt(jnp.sum(a2 * a2, axis=-1)), _COS_EPS)
    nb = jnp.maximum(jnp.sqrt(jnp.sum(b2 * b2, axis=-1)), _COS_EPS)
    cos = jnp.sum(a2 * b2, axis=-1) / (na * nb)
    return jnp.sum(jnp.maximum(cos * cos - eps, 0.0))


if __name__ == "__main__":
    key = jax.random.PRNGKey(0)
    k1, k2, k3, k4, k5, k6 = jax.random.split(key, 6)

    # TransH-style relation embeddings w_r and hyperplane normals d_r (D=32):
    # lane-dense packed path with a single partial block (masking exercised).
    w = jax.random.normal(k1, (16, 32), dtype=jnp.float32)
    d = jax.random.normal(k2, (16, 32), dtype=jnp.float32)
    reg = OrthogonalityRegularizer(weight=0.01)
    reg.update(w, d)
    term = jax.block_until_ready(reg.pop_regularization_term())
    expected = 0.01 * _ref_term(w, d, 1e-5)
    assert jnp.allclose(term, expected, rtol=1e-4, atol=1e-6), (term, expected)

    # bf16 streaming, multi-block grid with a partial last tile (and an odd block
    # count for the 2-way core split when running on a 2-TensorCore part).
    w2 = jax.random.normal(k3, (1100, 32), dtype=jnp.bfloat16)
    d2 = jax.random.normal(k4, (1100, 32), dtype=jnp.bfloat16)
    got = jax.block_until_ready(
        orthogonality_term(w2, d2, epsilon=1e-5, tile_rows=16))
    want = _ref_term(w2, d2, 1e-5)
    assert jnp.allclose(got, want, rtol=5e-3, atol=5e-3), (got, want)

    # Fallback path: D that is neither a divisor nor a multiple of 128
    # (lane-padded, ones reduction matrix on the MXU, partial block masked).
    w3 = jax.random.normal(k5, (37, 48), dtype=jnp.float32)
    d3 = jax.random.normal(k6, (37, 48), dtype=jnp.float32)
    got3 = jax.block_until_ready(orthogonality_term(w3, d3, epsilon=1e-5))
    want3 = _ref_term(w3, d3, 1e-5)
    assert jnp.allclose(got3, want3, rtol=1e-4, atol=1e-6), (got3, want3)

    print("KERNEL_OK")
</pallas_src>

<mosaic_0001>
module attributes {stable_mosaic.version = 11 : i64} {
  func.func @_orth_kernel(%arg0: i32, %arg1: i32, %arg2: memref<8x128xf32, #tpu.memory_space<vmem>>, %arg3: memref<8x128xf32, #tpu.memory_space<vmem>>, %arg4: memref<128x128xf32, #tpu.memory_space<vmem>>, %arg5: memref<8x128xf32, #tpu.memory_space<vmem>>, %arg6: memref<8x128xf32, #tpu.memory_space<vmem>>) attributes {dimension_semantics = [#tpu.dimension_semantics<parallel>, #tpu.dimension_semantics<arbitrary>], iteration_bounds = array<i64: 1, 1>, scalar_prefetch = 0 : i64, scratch_operands = 1 : i64, tpu.core_type = #tpu.core_type<tc>, window_params = [{transform_indices = @transform_0, window_bounds = array<i64: 8, 128>}, {transform_indices = @transform_1, window_bounds = array<i64: 8, 128>}, {pipeline_mode = #tpu.pipeline_mode<synchronous>, transform_indices = @transform_2, window_bounds = array<i64: 128, 128>}, {transform_indices = @transform_3, window_bounds = array<i64: 8, 128>}]} {
    %c0_i32 = arith.constant 0 : i32
    %0 = arith.cmpi eq, %arg1, %c0_i32 : i32
    %1 = arith.extui %0 : i1 to i32
    %c0_i32_0 = arith.constant 0 : i32
    %2 = arith.cmpi ne, %1, %c0_i32_0 : i32
    scf.if %2 {
      %cst_17 = arith.constant 0.000000e+00 : f32
      %36 = vector.broadcast %cst_17 : f32 to vector<8x128xf32>
      %c0_18 = arith.constant 0 : index
      %c0_19 = arith.constant 0 : index
      %37 = vector.load %arg6[%c0_18, %c0_19] : memref<8x128xf32, #tpu.memory_space<vmem>>, vector<8x128xf32>
      tpu.vector_store %arg6[%c0_18, %c0_19], %36 {strides = array<i32>} : memref<8x128xf32, #tpu.memory_space<vmem>>, vector<8x128xf32>,
    } else {
    }
    %c0 = arith.constant 0 : index
    %c0_1 = arith.constant 0 : index
    %3 = vector.load %arg2[%c0, %c0_1] : memref<8x128xf32, #tpu.memory_space<vmem>>, vector<8x128xf32>
    %c0_2 = arith.constant 0 : index
    %c0_3 = arith.constant 0 : index
    %4 = vector.load %arg3[%c0_2, %c0_3] : memref<8x128xf32, #tpu.memory_space<vmem>>, vector<8x128xf32>
    %c0_4 = arith.constant 0 : index
    %c0_5 = arith.constant 0 : index
    %5 = vector.load %arg4[%c0_4, %c0_5] : memref<128x128xf32, #tpu.memory_space<vmem>>, vector<128x128xf32>
    %6 = arith.mulf %3, %4 : vector<8x128xf32>
    %cst = arith.constant dense<0.000000e+00> : vector<8x128xf32>
    %7 = tpu.matmul %6, %5, %cst {dimension_numbers = #tpu.dot_dimension_numbers<[1], [0], [0], [1], [0, 0, 1, 1], [], []>, precision = #tpu.contract_precision<fp32>} : vector<8x128xf32>, vector<128x128xf32>, vector<8x128xf32> -> vector<8x128xf32>
    %8 = arith.mulf %3, %3 : vector<8x128xf32>
    %cst_6 = arith.constant dense<0.000000e+00> : vector<8x128xf32>
    %9 = tpu.matmul %8, %5, %cst_6 {dimension_numbers = #tpu.dot_dimension_numbers<[1], [0], [0], [1], [0, 0, 1, 1], [], []>, precision = #tpu.contract_precision<fp32>} : vector<8x128xf32>, vector<128x128xf32>, vector<8x128xf32> -> vector<8x128xf32>
    %10 = arith.mulf %4, %4 : vector<8x128xf32>
    %cst_7 = arith.constant dense<0.000000e+00> : vector<8x128xf32>
    %11 = tpu.matmul %10, %5, %cst_7 {dimension_numbers = #tpu.dot_dimension_numbers<[1], [0], [0], [1], [0, 0, 1, 1], [], []>, precision = #tpu.contract_precision<fp32>} : vector<8x128xf32>, vector<128x128xf32>, vector<8x128xf32> -> vector<8x128xf32>
    %cst_8 = arith.constant 1.000000e-16 : f32
    %12 = vector.broadcast %cst_8 : f32 to vector<8x128xf32>
    %13 = arith.maximumf %9, %12 : vector<8x128xf32>
    %cst_9 = arith.constant 1.000000e-16 : f32
    %14 = vector.broadcast %cst_9 : f32 to vector<8x128xf32>
    %15 = arith.maximumf %11, %14 : vector<8x128xf32>
    %16 = arith.mulf %13, %15 : vector<8x128xf32>
    %17 = arith.mulf %7, %7 : vector<8x128xf32>
    %18 = arith.divf %17, %16 : vector<8x128xf32>
    %cst_10 = arith.constant 9.99999974E-6 : f32
    %19 = vector.broadcast %cst_10 : f32 to vector<8x128xf32>
    %20 = arith.subf %18, %19 : vector<8x128xf32>
    %cst_11 = arith.constant 0.000000e+00 : f32
    %21 = vector.broadcast %cst_11 : f32 to vector<8x128xf32>
    %22 = arith.maximumf %20, %21 : vector<8x128xf32>
    %c1_i32 = arith.constant 1 : i32
    %23 = arith.muli %arg0, %c1_i32 : i32
    %24 = arith.addi %23, %arg1 : i32
    %c8_i32 = arith.constant 8 : i32
    %25 = arith.muli %24, %c8_i32 : i32
    %c8_i32_12 = arith.constant 8 : i32
    %26 = arith.addi %25, %c8_i32_12 : i32
    %c4_i32 = arith.constant 4 : i32
    %27 = arith.cmpi sgt, %26, %c4_i32 : i32
    %true = arith.constant true
    %28 = arith.xori %27, %true : i1
    %29 = arith.extui %28 : i1 to i32
    %c0_i32_13 = arith.constant 0 : i32
    %30 = arith.cmpi ne, %29, %c0_i32_13 : i32
    scf.if %30 {
      %c0_17 = arith.constant 0 : index
      %c0_18 = arith.constant 0 : index
      %36 = vector.load %arg6[%c0_17, %c0_18] : memref<8x128xf32, #tpu.memory_space<vmem>>, vector<8x128xf32>
      %37 = vector.shape_cast %22 : vector<8x128xf32> to vector<1x8x128xf32>
      %cst_19 = arith.constant dense<0.000000e+00> : vector<8x128xf32>
      %38 = vector.multi_reduction <add>, %37, %cst_19 [0] : vector<1x8x128xf32> to vector<8x128xf32>
      %39 = arith.addf %36, %38 : vector<8x128xf32>
      %c0_20 = arith.constant 0 : index
      %c0_21 = arith.constant 0 : index
      %40 = vector.load %arg6[%c0_20, %c0_21] : memref<8x128xf32, #tpu.memory_space<vmem>>, vector<8x128xf32>
      tpu.vector_store %arg6[%c0_20, %c0_21], %39 {strides = array<i32>} : memref<8x128xf32, #tpu.memory_space<vmem>>, vector<8x128xf32>,
    } else {
    }
    %31 = arith.extui %27 : i1 to i32
    %c0_i32_14 = arith.constant 0 : i32
    %32 = arith.cmpi ne, %31, %c0_i32_14 : i32
    scf.if %32 {
      %36 = tpu.iota {dimensions = array<i32: 0>} : vector<8x128xi32>
      %37 = vector.broadcast %25 : i32 to vector<8x128xi32>
      %38 = arith.addi %37, %36 : vector<8x128xi32>
      %c4_i32_17 = arith.constant 4 : i32
      %39 = vector.broadcast %c4_i32_17 : i32 to vector<8x128xi32>
      %40 = arith.cmpi slt, %38, %39 : vector<8x128xi32>
      %cst_18 = arith.constant 0.000000e+00 : f32
      %41 = vector.broadcast %cst_18 : f32 to vector<8x128xf32>
      %42 = arith.select %40, %22, %41 : vector<8x128xi1>, vector<8x128xf32>
      %c0_19 = arith.constant 0 : index
      %c0_20 = arith.constant 0 : index
      %43 = vector.load %arg6[%c0_19, %c0_20] : memref<8x128xf32, #tpu.memory_space<vmem>>, vector<8x128xf32>
      %44 = vector.shape_cast %42 : vector<8x128xf32> to vector<1x8x128xf32>
      %cst_21 = arith.constant dense<0.000000e+00> : vector<8x128xf32>
      %45 = vector.multi_reduction <add>, %44, %cst_21 [0] : vector<1x8x128xf32> to vector<8x128xf32>
      %46 = arith.addf %43, %45 : vector<8x128xf32>
      %c0_22 = arith.constant 0 : index
      %c0_23 = arith.constant 0 : index
      %47 = vector.load %arg6[%c0_22, %c0_23] : memref<8x128xf32, #tpu.memory_space<vmem>>, vector<8x128xf32>
      tpu.vector_store %arg6[%c0_22, %c0_23], %46 {strides = array<i32>} : memref<8x128xf32, #tpu.memory_space<vmem>>, vector<8x128xf32>,
    } else {
    }
    %c0_i32_15 = arith.constant 0 : i32
    %33 = arith.cmpi eq, %arg1, %c0_i32_15 : i32
    %34 = arith.extui %33 : i1 to i32
    %c0_i32_16 = arith.constant 0 : i32
    %35 = arith.cmpi ne, %34, %c0_i32_16 : i32
    scf.if %35 {
      %c0_17 = arith.constant 0 : index
      %c0_18 = arith.constant 0 : index
      %36 = vector.load %arg6[%c0_17, %c0_18] : memref<8x128xf32, #tpu.memory_space<vmem>>, vector<8x128xf32>
      %c0_19 = arith.constant 0 : index
      %c0_20 = arith.constant 0 : index
      %37 = vector.load %arg5[%c0_19, %c0_20] : memref<8x128xf32, #tpu.memory_space<vmem>>, vector<8x128xf32>
      tpu.vector_store %arg5[%c0_19, %c0_20], %36 {strides = array<i32>} : memref<8x128xf32, #tpu.memory_space<vmem>>, vector<8x128xf32>,
    } else {
    }
    return
  }
  func.func @transform_0(%arg0: i32, %arg1: i32) -> (i32, i32) {
    %c0_i32 = arith.constant 0 : i32
    %c0_i32_0 = arith.constant 0 : i32
    return %arg1, %c0_i32 : i32, i32
  }
  func.func @transform_1(%arg0: i32, %arg1: i32) -> (i32, i32) {
    %c0_i32 = arith.constant 0 : i32
    %c0_i32_0 = arith.constant 0 : i32
    return %arg1, %c0_i32 : i32, i32
  }
  func.func @transform_2(%arg0: i32, %arg1: i32) -> (i32, i32) {
    %c0_i32 = arith.constant 0 : i32
    %c0_i32_0 = arith.constant 0 : i32
    %c0_i32_1 = arith.constant 0 : i32
    return %c0_i32, %c0_i32_0 : i32, i32
  }
  func.func @transform_3(%arg0: i32, %arg1: i32) -> (i32, i32) {
    %c0_i32 = arith.constant 0 : i32
    %c0_i32_0 = arith.constant 0 : i32
    return %arg0, %c0_i32 : i32, i32
  }
}

</mosaic_0001>

<llo_original>
// kernel: tpu_custom_call.1
$region0: #{tpu_custom_call.1}
  #allocation0 [shape = 'u32[]', space=smem, size = 0x4, offset = 0x4, fixed_abs, tag = 'smem constant byte address 0x4 - core index']
  #allocation1 [shape = 'u32[144,128]{1,0:T(1,128)}', space=vmem, size = 0x12000, scoped, tag = 'internal scratch']
  #allocation2 [shape = 'f32[8,128]{1,0:T(8,128)}', space=vmem, size = 0x1000, scoped, tag = 'scratch operand']
  %s0 = inlined_call_operand.hbm [shape: f32[4,128], index: 0, kind: input, shape index: {}]
  %s1 = inlined_call_operand.hbm [shape: f32[4,128], index: 1, kind: input, shape index: {}]
  %s2 = inlined_call_operand.hbm [shape: f32[128,128], index: 2, kind: input, shape index: {}]
  %s3 = inlined_call_operand.hbm [shape: f32[8,128], index: 3, kind: output, shape index: {}]
  %s4 = sld [smem:[#allocation0]]
  $region50: #{tpu_custom_call.1} parent=0
    _
  %s6 = ssub.s32 1, %s4
  %s7 = scalar_select 0, %s6, %s4
  $region1: #{tpu_custom_call.1} parent=0
    #allocation3 [shape = 'u8[4096]{0}', space=vmem, size = 0x1000, scoped, tag = 'input window, operand 0, single buffered']
    #allocation4 [shape = 's32[1]{0}', space=sflag, size = 0x4, scoped, tag = 'scoped memory for tpu_custom_call.1']
    #allocation5 [shape = 's32[1]{0}', space=sflag, size = 0x4, scoped, tag = 'scoped memory for tpu_custom_call.1']
    #allocation6 [shape = 'u8[4096]{0}', space=vmem, size = 0x1000, scoped, tag = 'input window, operand 1, single buffered']
    #allocation7 [shape = 's32[1]{0}', space=sflag, size = 0x4, scoped, tag = 'scoped memory for tpu_custom_call.1']
    #allocation8 [shape = 'u8[65536]{0}', space=vmem, size = 0x10000, scoped, tag = 'input window, operand 2, single buffered']
    #allocation9 [shape = 'u8[4096]{0}', space=vmem, size = 0x1000, scoped, tag = 'output window, operand 0, single buffered']
    %8 = vsyncpa [#allocation4], 0
    %9 = vsyncpa [#allocation7], 0
    %10 = vsyncpa [#allocation5], 0
    // Predicated region
    $region2: #{tpu_custom_call.1} parent=1 // pred_check
      _
    $region3: #{tpu_custom_call.1} parent=1 // pred_check_branch
      %12 = sbr.rel (0) target = $region5
    $region4: #{tpu_custom_call.1} parent=1 // pred_region
      %s14 = ssub.s32 128, 64
      %15 = vsyncadd [#allocation4], %s14
      %s16 = sshll.u32 [#allocation3], 4
      %s17 = int_to_ptr.vmem [resolvable:$true] %s16
      %22 = dma.hbm_to_vmem [thread:$0]  %s0, 64, %s17, [#allocation4], 64, 64, 4
    $region5: #{tpu_custom_call.1} parent=1 // pred_fallthru
      _
    // Predicated region
    $region6: #{tpu_custom_call.1} parent=1 // pred_check
      _
    $region7: #{tpu_custom_call.1} parent=1 // pred_check_branch
      %24 = sbr.rel (0) target = $region9
    $region8: #{tpu_custom_call.1} parent=1 // pred_region
      %s26 = ssub.s32 128, 64
      %27 = vsyncadd [#allocation7], %s26
      %s28 = sshll.u32 [#allocation6], 4
      %s29 = int_to_ptr.vmem [resolvable:$true] %s28
      %34 = dma.hbm_to_vmem [thread:$0]  %s1, 64, %s29, [#allocation7], 64, 64, 4
    $region9: #{tpu_custom_call.1} parent=1 // pred_fallthru
      _
    // Predicated region
    $region10: #{tpu_custom_call.1} parent=1 // pred_check
      _
    $region11: #{tpu_custom_call.1} parent=1 // pred_check_branch
      %36 = sbr.rel (0) target = $region13
    $region12: #{tpu_custom_call.1} parent=1 // pred_region
      %s38 = ssub.s32 2048, 2048
      %39 = vsyncadd [#allocation7], %s38
      %s40 = sshll.u32 [#allocation8], 4
      %s41 = int_to_ptr.vmem [resolvable:$true] %s40
      %46 = dma.hbm_to_vmem [thread:$0]  %s2, 2048, %s41, [#allocation7], 128, 128, 8
    $region13: #{tpu_custom_call.1} parent=1 // pred_fallthru
      _
    // Predicated region
    $region14: #{tpu_custom_call.1} parent=1 // pred_check
      _
    $region15: #{tpu_custom_call.1} parent=1 // pred_check_branch
      %48 = sbr.rel (0) target = $region17
    $region16: #{tpu_custom_call.1} parent=1 // pred_region
      %49 = dma.done [#allocation4], 128
    $region17: #{tpu_custom_call.1} parent=1 // pred_fallthru
      _
    // Predicated region
    $region18: #{tpu_custom_call.1} parent=1 // pred_check
      _
    $region19: #{tpu_custom_call.1} parent=1 // pred_check_branch
      %51 = sbr.rel (0) target = $region21
    $region20: #{tpu_custom_call.1} parent=1 // pred_region
      %52 = dma.done [#allocation7], 128
    $region21: #{tpu_custom_call.1} parent=1 // pred_fallthru
      _
    // Predicated region
    $region22: #{tpu_custom_call.1} parent=1 // pred_check
      _
    $region23: #{tpu_custom_call.1} parent=1 // pred_check_branch
      %54 = sbr.rel (0) target = $region25
    $region24: #{tpu_custom_call.1} parent=1 // pred_region
      %55 = dma.done [#allocation7], 2048
    $region25: #{tpu_custom_call.1} parent=1 // pred_fallthru
      _
    %p56 = scmp.eq.s32.totalorder 0, 0
    // Predicated region
    $region26: #{tpu_custom_call.1} parent=1 // pred_check
      %p57 = pneg %p56
    $region27: #{tpu_custom_call.1} parent=1 // pred_check_branch
      %59 = sbr.rel (%p57) target = $region29
    $region28: #{tpu_custom_call.1} parent=1 // pred_region
      %60 = vst [vmem:[#allocation2] sm:$0xff] 0.0
    $region29: #{tpu_custom_call.1} parent=1 // pred_fallthru
      _
    %v61 = vld [vmem:[#allocation3] sm:$0xff]
    %v62 = vld [vmem:[#allocation6] sm:$0xff]
    %v63 = vld [vmem:[#allocation8] sm:$0xff]
    %v64 = vld [vmem:[#allocation8 + $0x8] sm:$0xff]
    %v65 = vld [vmem:[#allocation8 + $0x10] sm:$0xff]
    %v66 = vld [vmem:[#allocation8 + $0x18] sm:$0xff]
    %v67 = vld [vmem:[#allocation8 + $0x20] sm:$0xff]
    %v68 = vld [vmem:[#allocation8 + $0x28] sm:$0xff]
    %v69 = vld [vmem:[#allocation8 + $0x30] sm:$0xff]
    %v70 = vld [vmem:[#allocation8 + $0x38] sm:$0xff]
    %v71 = vld [vmem:[#allocation8 + $0x40] sm:$0xff]
    %v72 = vld [vmem:[#allocation8 + $0x48] sm:$0xff]
    %v73 = vld [vmem:[#allocation8 + $0x50] sm:$0xff]
    %v74 = vld [vmem:[#allocation8 + $0x58] sm:$0xff]
    %v75 = vld [vmem:[#allocation8 + $0x60] sm:$0xff]
    %v76 = vld [vmem:[#allocation8 + $0x68] sm:$0xff]
    %v77 = vld [vmem:[#allocation8 + $0x70] sm:$0xff]
    %v78 = vld [vmem:[#allocation8 + $0x78] sm:$0xff]
    %v79 = vmul.f32 %v61, %v62
    %80 = vmatprep.subr.mxu0 0.0
    %v81 = vand.u32 %v63, 4294901760
    %82 = vmatpush1.msra.mxu0 %v81
    %83 = vmatprep.subr.mxu0 0.0
    %v84 = vand.u32 %v64, 4294901760
    %85 = vmatpush1.msra.mxu0 %v84
    %86 = vmatprep.subr.mxu0 0.0
    %v87 = vand.u32 %v65, 4294901760
    %88 = vmatpush1.msra.mxu0 %v87
    %89 = vmatprep.subr.mxu0 0.0
    %v90 = vand.u32 %v66, 4294901760
    %91 = vmatpush1.msra.mxu0 %v90
    %92 = vmatprep.subr.mxu0 0.0
    %v93 = vand.u32 %v67, 4294901760
    %94 = vmatpush1.msra.mxu0 %v93
    %95 = vmatprep.subr.mxu0 0.0
    %v96 = vand.u32 %v68, 4294901760
    %97 = vmatpush1.msra.mxu0 %v96
    %98 = vmatprep.subr.mxu0 0.0
    %v99 = vand.u32 %v69, 4294901760
    %100 = vmatpush1.msra.mxu0 %v99
    %101 = vmatprep.subr.mxu0 0.0
    %v102 = vand.u32 %v70, 4294901760
    %103 = vmatpush1.msra.mxu0 %v102
    %104 = vmatprep.subr.mxu0 0.0
    %v105 = vand.u32 %v71, 4294901760
    %106 = vmatpush1.msra.mxu0 %v105
    %107 = vmatprep.subr.mxu0 0.0
    %v108 = vand.u32 %v72, 4294901760
    %109 = vmatpush1.msra.mxu0 %v108
    %110 = vmatprep.subr.mxu0 0.0
    %v111 = vand.u32 %v73, 4294901760
    %112 = vmatpush1.msra.mxu0 %v111
    %113 = vmatprep.subr.mxu0 0.0
    %v114 = vand.u32 %v74, 4294901760
    %115 = vmatpush1.msra.mxu0 %v114
    %116 = vmatprep.subr.mxu0 0.0
    %v117 = vand.u32 %v75, 4294901760
    %118 = vmatpush1.msra.mxu0 %v117
    %119 = vmatprep.subr.mxu0 0.0
    %v120 = vand.u32 %v76, 4294901760
    %121 = vmatpush1.msra.mxu0 %v120
    %122 = vmatprep.subr.mxu0 0.0
    %v123 = vand.u32 %v77, 4294901760
    %124 = vmatpush1.msra.mxu0 %v123
    %125 = vmatprep.subr.mxu0 0.0
    %v126 = vand.u32 %v78, 4294901760
    %127 = vmatpush1.msra.mxu0 %v126
    %128 = vmatprep.subr.mxu0 0.0
    %129 = vmatpush1.msra.mxu0 0.0
    %130 = vmatprep.subr.mxu0 0.0
    %131 = vmatpush1.msra.mxu0 0.0
    %132 = vmatprep.subr.mxu0 0.0
    %133 = vmatpush1.msra.mxu0 0.0
    %134 = vmatprep.subr.mxu0 0.0
    %135 = vmatpush1.msra.mxu0 0.0
    %136 = vmatprep.subr.mxu0 0.0
    %137 = vmatpush1.msra.mxu0 0.0
    %138 = vmatprep.subr.mxu0 0.0
    %139 = vmatpush1.msra.mxu0 0.0
    %140 = vmatprep.subr.mxu0 0.0
    %141 = vmatpush1.msra.mxu0 0.0
    %142 = vmatprep.subr.mxu0 0.0
    %143 = vmatpush1.msra.mxu0 0.0
    %144 = vmatprep.subr.mxu0 0.0
    %145 = vmatpush1.msra.mxu0 0.0
    %146 = vmatprep.subr.mxu0 0.0
    %147 = vmatpush1.msra.mxu0 0.0
    %148 = vmatprep.subr.mxu0 0.0
    %149 = vmatpush1.msra.mxu0 0.0
    %150 = vmatprep.subr.mxu0 0.0
    %151 = vmatpush1.msra.mxu0 0.0
    %152 = vmatprep.subr.mxu0 0.0
    %153 = vmatpush1.msra.mxu0 0.0
    %154 = vmatprep.subr.mxu0 0.0
    %155 = vmatpush1.msra.mxu0 0.0
    %156 = vmatprep.subr.mxu0 0.0
    %157 = vmatpush1.msra.mxu0 0.0
    %158 = vmatprep.subr.mxu0 0.0
    %159 = vmatpush1.msra.mxu0 0.0
    %160 = vmatprep.mubr.f32.mxu0 0.0
    %v161 = vand.u32 %v79, 4294901760
    %v162 = vsub.f32 %v79, %v161
    %v163 = vand.u32 %v162, 4294901760
    %v164 = vsub.f32 %v162, %v163
    %v165 = vand.u32 %v164, 4294901760
    %166 = vmatmul.mubr.f32.gmra.mrb[0].mxu0 %v165
    %v167 = vpop.f32.mrb[0].mxu0
    %v168 = vadd.f32 0.0, %v167
    %v169 = vpop.f32.mrb[0].mxu0
    %170 = vdwg.mxu0
    %171 = vmatprep.subr.mxu0 0.0
    %v172 = vand.u32 %v63, 4294901760
    %v173 = vsub.f32 %v63, %v172
    %v174 = vand.u32 %v173, 4294901760
    %v175 = vsub.f32 %v173, %v174
    %v176 = vand.u32 %v175, 4294901760
    %177 = vmatpush1.msra.mxu0 %v176
    %178 = vmatprep.subr.mxu0 0.0
    %v179 = vand.u32 %v64, 4294901760
    %v180 = vsub.f32 %v64, %v179
    %v181 = vand.u32 %v180, 4294901760
    %v182 = vsub.f32 %v180, %v181
    %v183 = vand.u32 %v182, 4294901760
    %184 = vmatpush1.msra.mxu0 %v183
    %185 = vmatprep.subr.mxu0 0.0
    %v186 = vand.u32 %v65, 4294901760
    %v187 = vsub.f32 %v65, %v186
    %v188 = vand.u32 %v187, 4294901760
    %v189 = vsub.f32 %v187, %v188
    %v190 = vand.u32 %v189, 4294901760
    %191 = vmatpush1.msra.mxu0 %v190
    %192 = vmatprep.subr.mxu0 0.0
    %v193 = vand.u32 %v66, 4294901760
    %v194 = vsub.f32 %v66, %v193
    %v195 = vand.u32 %v194, 4294901760
    %v196 = vsub.f32 %v194, %v195
    %v197 = vand.u32 %v196, 4294901760
    %198 = vmatpush1.msra.mxu0 %v197
    %199 = vmatprep.subr.mxu0 0.0
    %v200 = vand.u32 %v67, 4294901760
    %v201 = vsub.f32 %v67, %v200
    %v202 = vand.u32 %v201, 4294901760
    %v203 = vsub.f32 %v201, %v202
    %v204 = vand.u32 %v203, 4294901760
    %205 = vmatpush1.msra.mxu0 %v204
    %206 = vmatprep.subr.mxu0 0.0
    %v207 = vand.u32 %v68, 4294901760
    %v208 = vsub.f32 %v68, %v207
    %v209 = vand.u32 %v208, 4294901760
    %v210 = vsub.f32 %v208, %v209
    %v211 = vand.u32 %v210, 4294901760
    %212 = vmatpush1.msra.mxu0 %v211
    %213 = vmatprep.subr.mxu0 0.0
    %v214 = vand.u32 %v69, 4294901760
    %v215 = vsub.f32 %v69, %v214
    %v216 = vand.u32 %v215, 4294901760
    %v217 = vsub.f32 %v215, %v216
    %v218 = vand.u32 %v217, 4294901760
    %219 = vmatpush1.msra.mxu0 %v218
    %220 = vmatprep.subr.mxu0 0.0
    %v221 = vand.u32 %v70, 4294901760
    %v222 = vsub.f32 %v70, %v221
    %v223 = vand.u32 %v222, 4294901760
    %v224 = vsub.f32 %v222, %v223
    %v225 = vand.u32 %v224, 4294901760
    %226 = vmatpush1.msra.mxu0 %v225
    %227 = vmatprep.subr.mxu0 0.0
    %v228 = vand.u32 %v71, 4294901760
    %v229 = vsub.f32 %v71, %v228
    %v230 = vand.u32 %v229, 4294901760
    %v231 = vsub.f32 %v229, %v230
    %v232 = vand.u32 %v231, 4294901760
    %233 = vmatpush1.msra.mxu0 %v232
    %234 = vmatprep.subr.mxu0 0.0
    %v235 = vand.u32 %v72, 4294901760
    %v236 = vsub.f32 %v72, %v235
    %v237 = vand.u32 %v236, 4294901760
    %v238 = vsub.f32 %v236, %v237
    %v239 = vand.u32 %v238, 4294901760
    %240 = vmatpush1.msra.mxu0 %v239
    %241 = vmatprep.subr.mxu0 0.0
    %v242 = vand.u32 %v73, 4294901760
    %v243 = vsub.f32 %v73, %v242
    %v244 = vand.u32 %v243, 4294901760
    %v245 = vsub.f32 %v243, %v244
    %v246 = vand.u32 %v245, 4294901760
    %247 = vmatpush1.msra.mxu0 %v246
    %248 = vmatprep.subr.mxu0 0.0
    %v249 = vand.u32 %v74, 4294901760
    %v250 = vsub.f32 %v74, %v249
    %v251 = vand.u32 %v250, 4294901760
    %v252 = vsub.f32 %v250, %v251
    %v253 = vand.u32 %v252, 4294901760
    %254 = vmatpush1.msra.mxu0 %v253
    %255 = vmatprep.subr.mxu0 0.0
    %v256 = vand.u32 %v75, 4294901760
    %v257 = vsub.f32 %v75, %v256
    %v258 = vand.u32 %v257, 4294901760
    %v259 = vsub.f32 %v257, %v258
    %v260 = vand.u32 %v259, 4294901760
    %261 = vmatpush1.msra.mxu0 %v260
    %262 = vmatprep.subr.mxu0 0.0
    %v263 = vand.u32 %v76, 4294901760
    %v264 = vsub.f32 %v76, %v263
    %v265 = vand.u32 %v264, 4294901760
    %v266 = vsub.f32 %v264, %v265
    %v267 = vand.u32 %v266, 4294901760
    %268 = vmatpush1.msra.mxu0 %v267
    %269 = vmatprep.subr.mxu0 0.0
    %v270 = vand.u32 %v77, 4294901760
    %v271 = vsub.f32 %v77, %v270
    %v272 = vand.u32 %v271, 4294901760
    %v273 = vsub.f32 %v271, %v272
    %v274 = vand.u32 %v273, 4294901760
    %275 = vmatpush1.msra.mxu0 %v274
    %276 = vmatprep.subr.mxu0 0.0
    %v277 = vand.u32 %v78, 4294901760
    %v278 = vsub.f32 %v78, %v277
    %v279 = vand.u32 %v278, 4294901760
    %v280 = vsub.f32 %v278, %v279
    %v281 = vand.u32 %v280, 4294901760
    %282 = vmatpush1.msra.mxu0 %v281
    %283 = vmatprep.subr.mxu0 0.0
    %284 = vmatpush1.msra.mxu0 0.0
    %285 = vmatprep.subr.mxu0 0.0
    %286 = vmatpush1.msra.mxu0 0.0
    %287 = vmatprep.subr.mxu0 0.0
    %288 = vmatpush1.msra.mxu0 0.0
    %289 = vmatprep.subr.mxu0 0.0
    %290 = vmatpush1.msra.mxu0 0.0
    %291 = vmatprep.subr.mxu0 0.0
    %292 = vmatpush1.msra.mxu0 0.0
    %293 = vmatprep.subr.mxu0 0.0
    %294 = vmatpush1.msra.mxu0 0.0
    %295 = vmatprep.subr.mxu0 0.0
    %296 = vmatpush1.msra.mxu0 0.0
    %297 = vmatprep.subr.mxu0 0.0
    %298 = vmatpush1.msra.mxu0 0.0
    %299 = vmatprep.subr.mxu0 0.0
    %300 = vmatpush1.msra.mxu0 0.0
    %301 = vmatprep.subr.mxu0 0.0
    %302 = vmatpush1.msra.mxu0 0.0
    %303 = vmatprep.subr.mxu0 0.0
    %304 = vmatpush1.msra.mxu0 0.0
    %305 = vmatprep.subr.mxu0 0.0
    %306 = vmatpush1.msra.mxu0 0.0
    %307 = vmatprep.subr.mxu0 0.0
    %308 = vmatpush1.msra.mxu0 0.0
    %309 = vmatprep.subr.mxu0 0.0
    %310 = vmatpush1.msra.mxu0 0.0
    %311 = vmatprep.subr.mxu0 0.0
    %312 = vmatpush1.msra.mxu0 0.0
    %313 = vmatprep.subr.mxu0 0.0
    %314 = vmatpush1.msra.mxu0 0.0
    %315 = vmatprep.mubr.f32.mxu0 0.0
    %v316 = vand.u32 %v79, 4294901760
    %317 = vmatmul.mubr.f32.gmra.mrb[0].mxu0 %v316
    %v318 = vpop.f32.mrb[0].mxu0
    %v319 = vadd.f32 %v168, %v318
    %v320 = vpop.f32.mrb[0].mxu0
    %321 = vdwg.mxu0
    %322 = vmatprep.subr.mxu0 0.0
    %v323 = vand.u32 %v63, 4294901760
    %v324 = vsub.f32 %v63, %v323
    %325 = vmatpush1.msra.mxu0 %v324
    %326 = vmatprep.subr.mxu0 0.0
    %v327 = vand.u32 %v64, 4294901760
    %v328 = vsub.f32 %v64, %v327
    %329 = vmatpush1.msra.mxu0 %v328
    %330 = vmatprep.subr.mxu0 0.0
    %v331 = vand.u32 %v65, 4294901760
    %v332 = vsub.f32 %v65, %v331
    %333 = vmatpush1.msra.mxu0 %v332
    %334 = vmatprep.subr.mxu0 0.0
    %v335 = vand.u32 %v66, 4294901760
    %v336 = vsub.f32 %v66, %v335
    %337 = vmatpush1.msra.mxu0 %v336
    %338 = vmatprep.subr.mxu0 0.0
    %v339 = vand.u32 %v67, 4294901760
    %v340 = vsub.f32 %v67, %v339
    %341 = vmatpush1.msra.mxu0 %v340
    %342 = vmatprep.subr.mxu0 0.0
    %v343 = vand.u32 %v68, 4294901760
    %v344 = vsub.f32 %v68, %v343
    %345 = vmatpush1.msra.mxu0 %v344
    %346 = vmatprep.subr.mxu0 0.0
    %v347 = vand.u32 %v69, 4294901760
    %v348 = vsub.f32 %v69, %v347
    %349 = vmatpush1.msra.mxu0 %v348
    %350 = vmatprep.subr.mxu0 0.0
    %v351 = vand.u32 %v70, 4294901760
    %v352 = vsub.f32 %v70, %v351
    %353 = vmatpush1.msra.mxu0 %v352
    %354 = vmatprep.subr.mxu0 0.0
    %v355 = vand.u32 %v71, 4294901760
    %v356 = vsub.f32 %v71, %v355
    %357 = vmatpush1.msra.mxu0 %v356
    %358 = vmatprep.subr.mxu0 0.0
    %v359 = vand.u32 %v72, 4294901760
    %v360 = vsub.f32 %v72, %v359
    %361 = vmatpush1.msra.mxu0 %v360
    %362 = vmatprep.subr.mxu0 0.0
    %v363 = vand.u32 %v73, 4294901760
    %v364 = vsub.f32 %v73, %v363
    %365 = vmatpush1.msra.mxu0 %v364
    %366 = vmatprep.subr.mxu0 0.0
    %v367 = vand.u32 %v74, 4294901760
    %v368 = vsub.f32 %v74, %v367
    %369 = vmatpush1.msra.mxu0 %v368
    %370 = vmatprep.subr.mxu0 0.0
    %v371 = vand.u32 %v75, 4294901760
    %v372 = vsub.f32 %v75, %v371
    %373 = vmatpush1.msra.mxu0 %v372
    %374 = vmatprep.subr.mxu0 0.0
    %v375 = vand.u32 %v76, 4294901760
    %v376 = vsub.f32 %v76, %v375
    %377 = vmatpush1.msra.mxu0 %v376
    %378 = vmatprep.subr.mxu0 0.0
    %v379 = vand.u32 %v77, 4294901760
    %v380 = vsub.f32 %v77, %v379
    %381 = vmatpush1.msra.mxu0 %v380
    %382 = vmatprep.subr.mxu0 0.0
    %v383 = vand.u32 %v78, 4294901760
    %v384 = vsub.f32 %v78, %v383
    %385 = vmatpush1.msra.mxu0 %v384
    %386 = vmatprep.subr.mxu0 0.0
    %387 = vmatpush1.msra.mxu0 0.0
    %388 = vmatprep.subr.mxu0 0.0
    %389 = vmatpush1.msra.mxu0 0.0
    %390 = vmatprep.subr.mxu0 0.0
    %391 = vmatpush1.msra.mxu0 0.0
    %392 = vmatprep.subr.mxu0 0.0
    %393 = vmatpush1.msra.mxu0 0.0
    %394 = vmatprep.subr.mxu0 0.0
    %395 = vmatpush1.msra.mxu0 0.0
    %396 = vmatprep.subr.mxu0 0.0
    %397 = vmatpush1.msra.mxu0 0.0
    %398 = vmatprep.subr.mxu0 0.0
    %399 = vmatpush1.msra.mxu0 0.0
    %400 = vmatprep.subr.mxu0 0.0
    %401 = vmatpush1.msra.mxu0 0.0
    %402 = vmatprep.subr.mxu0 0.0
    %403 = vmatpush1.msra.mxu0 0.0
    %404 = vmatprep.subr.mxu0 0.0
    %405 = vmatpush1.msra.mxu0 0.0
    %406 = vmatprep.subr.mxu0 0.0
    %407 = vmatpush1.msra.mxu0 0.0
    %408 = vmatprep.subr.mxu0 0.0
    %409 = vmatpush1.msra.mxu0 0.0
    %410 = vmatprep.subr.mxu0 0.0
    %411 = vmatpush1.msra.mxu0 0.0
    %412 = vmatprep.subr.mxu0 0.0
    %413 = vmatpush1.msra.mxu0 0.0
    %414 = vmatprep.subr.mxu0 0.0
    %415 = vmatpush1.msra.mxu0 0.0
    %416 = vmatprep.subr.mxu0 0.0
    %417 = vmatpush1.msra.mxu0 0.0
    %418 = vmatprep.mubr.f32.mxu0 0.0
    %v419 = vand.u32 %v79, 4294901760
    %v420 = vsub.f32 %v79, %v419
    %421 = vmatmul.mubr.f32.gmra.mrb[0].mxu0 %v420
    %v422 = vpop.f32.mrb[0].mxu0
    %v423 = vadd.f32 %v319, %v422
    %v424 = vpop.f32.mrb[0].mxu0
    %425 = vdwg.mxu0
    %426 = vmatprep.subr.mxu0 0.0
    %v427 = vand.u32 %v63, 4294901760
    %428 = vmatpush1.msra.mxu0 %v427
    %429 = vmatprep.subr.mxu0 0.0
    %v430 = vand.u32 %v64, 4294901760
    %431 = vmatpush1.msra.mxu0 %v430
    %432 = vmatprep.subr.mxu0 0.0
    %v433 = vand.u32 %v65, 4294901760
    %434 = vmatpush1.msra.mxu0 %v433
    %435 = vmatprep.subr.mxu0 0.0
    %v436 = vand.u32 %v66, 4294901760
    %437 = vmatpush1.msra.mxu0 %v436
    %438 = vmatprep.subr.mxu0 0.0
    %v439 = vand.u32 %v67, 4294901760
    %440 = vmatpush1.msra.mxu0 %v439
    %441 = vmatprep.subr.mxu0 0.0
    %v442 = vand.u32 %v68, 4294901760
    %443 = vmatpush1.msra.mxu0 %v442
    %444 = vmatprep.subr.mxu0 0.0
    %v445 = vand.u32 %v69, 4294901760
    %446 = vmatpush1.msra.mxu0 %v445
    %447 = vmatprep.subr.mxu0 0.0
    %v448 = vand.u32 %v70, 4294901760
    %449 = vmatpush1.msra.mxu0 %v448
    %450 = vmatprep.subr.mxu0 0.0
    %v451 = vand.u32 %v71, 4294901760
    %452 = vmatpush1.msra.mxu0 %v451
    %453 = vmatprep.subr.mxu0 0.0
    %v454 = vand.u32 %v72, 4294901760
    %455 = vmatpush1.msra.mxu0 %v454
    %456 = vmatprep.subr.mxu0 0.0
    %v457 = vand.u32 %v73, 4294901760
    %458 = vmatpush1.msra.mxu0 %v457
    %459 = vmatprep.subr.mxu0 0.0
    %v460 = vand.u32 %v74, 4294901760
    %461 = vmatpush1.msra.mxu0 %v460
    %462 = vmatprep.subr.mxu0 0.0
    %v463 = vand.u32 %v75, 4294901760
    %464 = vmatpush1.msra.mxu0 %v463
    %465 = vmatprep.subr.mxu0 0.0
    %v466 = vand.u32 %v76, 4294901760
    %467 = vmatpush1.msra.mxu0 %v466
    %468 = vmatprep.subr.mxu0 0.0
    %v469 = vand.u32 %v77, 4294901760
    %470 = vmatpush1.msra.mxu0 %v469
    %471 = vmatprep.subr.mxu0 0.0
    %v472 = vand.u32 %v78, 4294901760
    %473 = vmatpush1.msra.mxu0 %v472
    %474 = vmatprep.subr.mxu0 0.0
    %475 = vmatpush1.msra.mxu0 0.0
    %476 = vmatprep.subr.mxu0 0.0
    %477 = vmatpush1.msra.mxu0 0.0
    %478 = vmatprep.subr.mxu0 0.0
    %479 = vmatpush1.msra.mxu0 0.0
    %480 = vmatprep.subr.mxu0 0.0
    %481 = vmatpush1.msra.mxu0 0.0
    %482 = vmatprep.subr.mxu0 0.0
    %483 = vmatpush1.msra.mxu0 0.0
    %484 = vmatprep.subr.mxu0 0.0
    %485 = vmatpush1.msra.mxu0 0.0
    %486 = vmatprep.subr.mxu0 0.0
    %487 = vmatpush1.msra.mxu0 0.0
    %488 = vmatprep.subr.mxu0 0.0
    %489 = vmatpush1.msra.mxu0 0.0
    %490 = vmatprep.subr.mxu0 0.0
    %491 = vmatpush1.msra.mxu0 0.0
    %492 = vmatprep.subr.mxu0 0.0
    %493 = vmatpush1.msra.mxu0 0.0
    %494 = vmatprep.subr.mxu0 0.0
    %495 = vmatpush1.msra.mxu0 0.0
    %496 = vmatprep.subr.mxu0 0.0
    %497 = vmatpush1.msra.mxu0 0.0
    %498 = vmatprep.subr.mxu0 0.0
    %499 = vmatpush1.msra.mxu0 0.0
    %500 = vmatprep.subr.mxu0 0.0
    %501 = vmatpush1.msra.mxu0 0.0
    %502 = vmatprep.subr.mxu0 0.0
    %503 = vmatpush1.msra.mxu0 0.0
    %504 = vmatprep.subr.mxu0 0.0
    %505 = vmatpush1.msra.mxu0 0.0
    %506 = vmatprep.mubr.f32.mxu0 0.0
    %v507 = vand.u32 %v79, 4294901760
    %v508 = vsub.f32 %v79, %v507
    %v509 = vand.u32 %v508, 4294901760
    %510 = vmatmul.mubr.f32.gmra.mrb[0].mxu0 %v509
    %v511 = vpop.f32.mrb[0].mxu0
    %v512 = vadd.f32 %v423, %v511
    %v513 = vpop.f32.mrb[0].mxu0
    %514 = vdwg.mxu0
    %515 = vmatprep.subr.mxu0 0.0
    %v516 = vand.u32 %v63, 4294901760
    %v517 = vsub.f32 %v63, %v516
    %v518 = vand.u32 %v517, 4294901760
    %519 = vmatpush1.msra.mxu0 %v518
    %520 = vmatprep.subr.mxu0 0.0
    %v521 = vand.u32 %v64, 4294901760
    %v522 = vsub.f32 %v64, %v521
    %v523 = vand.u32 %v522, 4294901760
    %524 = vmatpush1.msra.mxu0 %v523
    %525 = vmatprep.subr.mxu0 0.0
    %v526 = vand.u32 %v65, 4294901760
    %v527 = vsub.f32 %v65, %v526
    %v528 = vand.u32 %v527, 4294901760
    %529 = vmatpush1.msra.mxu0 %v528
    %530 = vmatprep.subr.mxu0 0.0
    %v531 = vand.u32 %v66, 4294901760
    %v532 = vsub.f32 %v66, %v531
    %v533 = vand.u32 %v532, 4294901760
    %534 = vmatpush1.msra.mxu0 %v533
    %535 = vmatprep.subr.mxu0 0.0
    %v536 = vand.u32 %v67, 4294901760
    %v537 = vsub.f32 %v67, %v536
    %v538 = vand.u32 %v537, 4294901760
    %539 = vmatpush1.msra.mxu0 %v538
    %540 = vmatprep.subr.mxu0 0.0
    %v541 = vand.u32 %v68, 4294901760
    %v542 = vsub.f32 %v68, %v541
    %v543 = vand.u32 %v542, 4294901760
    %544 = vmatpush1.msra.mxu0 %v543
    %545 = vmatprep.subr.mxu0 0.0
    %v546 = vand.u32 %v69, 4294901760
    %v547 = vsub.f32 %v69, %v546
    %v548 = vand.u32 %v547, 4294901760
    %549 = vmatpush1.msra.mxu0 %v548
    %550 = vmatprep.subr.mxu0 0.0
    %v551 = vand.u32 %v70, 4294901760
    %v552 = vsub.f32 %v70, %v551
    %v553 = vand.u32 %v552, 4294901760
    %554 = vmatpush1.msra.mxu0 %v553
    %555 = vmatprep.subr.mxu0 0.0
    %v556 = vand.u32 %v71, 4294901760
    %v557 = vsub.f32 %v71, %v556
    %v558 = vand.u32 %v557, 4294901760
    %559 = vmatpush1.msra.mxu0 %v558
    %560 = vmatprep.subr.mxu0 0.0
    %v561 = vand.u32 %v72, 4294901760
    %v562 = vsub.f32 %v72, %v561
    %v563 = vand.u32 %v562, 4294901760
    %564 = vmatpush1.msra.mxu0 %v563
    %565 = vmatprep.subr.mxu0 0.0
    %v566 = vand.u32 %v73, 4294901760
    %v567 = vsub.f32 %v73, %v566
    %v568 = vand.u32 %v567, 4294901760
    %569 = vmatpush1.msra.mxu0 %v568
    %570 = vmatprep.subr.mxu0 0.0
    %v571 = vand.u32 %v74, 4294901760
    %v572 = vsub.f32 %v74, %v571
    %v573 = vand.u32 %v572, 4294901760
    %574 = vmatpush1.msra.mxu0 %v573
    %575 = vmatprep.subr.mxu0 0.0
    %v576 = vand.u32 %v75, 4294901760
    %v577 = vsub.f32 %v75, %v576
    %v578 = vand.u32 %v577, 4294901760
    %579 = vmatpush1.msra.mxu0 %v578
    %580 = vmatprep.subr.mxu0 0.0
    %v581 = vand.u32 %v76, 4294901760
    %v582 = vsub.f32 %v76, %v581
    %v583 = vand.u32 %v582, 4294901760
    %584 = vmatpush1.msra.mxu0 %v583
    %585 = vmatprep.subr.mxu0 0.0
    %v586 = vand.u32 %v77, 4294901760
    %v587 = vsub.f32 %v77, %v586
    %v588 = vand.u32 %v587, 4294901760
    %589 = vmatpush1.msra.mxu0 %v588
    %590 = vmatprep.subr.mxu0 0.0
    %v591 = vand.u32 %v78, 4294901760
    %v592 = vsub.f32 %v78, %v591
    %v593 = vand.u32 %v592, 4294901760
    %594 = vmatpush1.msra.mxu0 %v593
    %595 = vmatprep.subr.mxu0 0.0
    %596 = vmatpush1.msra.mxu0 0.0
    %597 = vmatprep.subr.mxu0 0.0
    %598 = vmatpush1.msra.mxu0 0.0
    %599 = vmatprep.subr.mxu0 0.0
    %600 = vmatpush1.msra.mxu0 0.0
    %601 = vmatprep.subr.mxu0 0.0
    %602 = vmatpush1.msra.mxu0 0.0
    %603 = vmatprep.subr.mxu0 0.0
    %604 = vmatpush1.msra.mxu0 0.0
    %605 = vmatprep.subr.mxu0 0.0
    %606 = vmatpush1.msra.mxu0 0.0
    %607 = vmatprep.subr.mxu0 0.0
    %608 = vmatpush1.msra.mxu0 0.0
    %609 = vmatprep.subr.mxu0 0.0
    %610 = vmatpush1.msra.mxu0 0.0
    %611 = vmatprep.subr.mxu0 0.0
    %612 = vmatpush1.msra.mxu0 0.0
    %613 = vmatprep.subr.mxu0 0.0
    %614 = vmatpush1.msra.mxu0 0.0
    %615 = vmatprep.subr.mxu0 0.0
    %616 = vmatpush1.msra.mxu0 0.0
    %617 = vmatprep.subr.mxu0 0.0
    %618 = vmatpush1.msra.mxu0 0.0
    %619 = vmatprep.subr.mxu0 0.0
    %620 = vmatpush1.msra.mxu0 0.0
    %621 = vmatprep.subr.mxu0 0.0
    %622 = vmatpush1.msra.mxu0 0.0
    %623 = vmatprep.subr.mxu0 0.0
    %624 = vmatpush1.msra.mxu0 0.0
    %625 = vmatprep.subr.mxu0 0.0
    %626 = vmatpush1.msra.mxu0 0.0
    %627 = vmatprep.mubr.f32.mxu0 0.0
    %v628 = vand.u32 %v79, 4294901760
    %629 = vmatmul.mubr.f32.gmra.mrb[0].mxu0 %v628
    %v630 = vpop.f32.mrb[0].mxu0
    %v631 = vadd.f32 %v512, %v630
    %v632 = vpop.f32.mrb[0].mxu0
    %633 = vdwg.mxu0
    %634 = vmatprep.subr.mxu0 0.0
    %v635 = vand.u32 %v63, 4294901760
    %636 = vmatpush1.msra.mxu0 %v635
    %637 = vmatprep.subr.mxu0 0.0
    %v638 = vand.u32 %v64, 4294901760
    %639 = vmatpush1.msra.mxu0 %v638
    %640 = vmatprep.subr.mxu0 0.0
    %v641 = vand.u32 %v65, 4294901760
    %642 = vmatpush1.msra.mxu0 %v641
    %643 = vmatprep.subr.mxu0 0.0
    %v644 = vand.u32 %v66, 4294901760
    %645 = vmatpush1.msra.mxu0 %v644
    %646 = vmatprep.subr.mxu0 0.0
    %v647 = vand.u32 %v67, 4294901760
    %648 = vmatpush1.msra.mxu0 %v647
    %649 = vmatprep.subr.mxu0 0.0
    %v650 = vand.u32 %v68, 4294901760
    %651 = vmatpush1.msra.mxu0 %v650
    %652 = vmatprep.subr.mxu0 0.0
    %v653 = vand.u32 %v69, 4294901760
    %654 = vmatpush1.msra.mxu0 %v653
    %655 = vmatprep.subr.mxu0 0.0
    %v656 = vand.u32 %v70, 4294901760
    %657 = vmatpush1.msra.mxu0 %v656
    %658 = vmatprep.subr.mxu0 0.0
    %v659 = vand.u32 %v71, 4294901760
    %660 = vmatpush1.msra.mxu0 %v659
    %661 = vmatprep.subr.mxu0 0.0
    %v662 = vand.u32 %v72, 4294901760
    %663 = vmatpush1.msra.mxu0 %v662
    %664 = vmatprep.subr.mxu0 0.0
    %v665 = vand.u32 %v73, 4294901760
    %666 = vmatpush1.msra.mxu0 %v665
    %667 = vmatprep.subr.mxu0 0.0
    %v668 = vand.u32 %v74, 4294901760
    %669 = vmatpush1.msra.mxu0 %v668
    %670 = vmatprep.subr.mxu0 0.0
    %v671 = vand.u32 %v75, 4294901760
    %672 = vmatpush1.msra.mxu0 %v671
    %673 = vmatprep.subr.mxu0 0.0
    %v674 = vand.u32 %v76, 4294901760
    %675 = vmatpush1.msra.mxu0 %v674
    %676 = vmatprep.subr.mxu0 0.0
    %v677 = vand.u32 %v77, 4294901760
    %678 = vmatpush1.msra.mxu0 %v677
    %679 = vmatprep.subr.mxu0 0.0
    %v680 = vand.u32 %v78, 4294901760
    %681 = vmatpush1.msra.mxu0 %v680
    %682 = vmatprep.subr.mxu0 0.0
    %683 = vmatpush1.msra.mxu0 0.0
    %684 = vmatprep.subr.mxu0 0.0
    %685 = vmatpush1.msra.mxu0 0.0
    %686 = vmatprep.subr.mxu0 0.0
    %687 = vmatpush1.msra.mxu0 0.0
    %688 = vmatprep.subr.mxu0 0.0
    %689 = vmatpush1.msra.mxu0 0.0
    %690 = vmatprep.subr.mxu0 0.0
    %691 = vmatpush1.msra.mxu0 0.0
    %692 = vmatprep.subr.mxu0 0.0
    %693 = vmatpush1.msra.mxu0 0.0
    %694 = vmatprep.subr.mxu0 0.0
    %695 = vmatpush1.msra.mxu0 0.0
    %696 = vmatprep.subr.mxu0 0.0
    %697 = vmatpush1.msra.mxu0 0.0
    %698 = vmatprep.subr.mxu0 0.0
    %699 = vmatpush1.msra.mxu0 0.0
    %700 = vmatprep.subr.mxu0 0.0
    %701 = vmatpush1.msra.mxu0 0.0
    %702 = vmatprep.subr.mxu0 0.0
    %703 = vmatpush1.msra.mxu0 0.0
    %704 = vmatprep.subr.mxu0 0.0
    %705 = vmatpush1.msra.mxu0 0.0
    %706 = vmatprep.subr.mxu0 0.0
    %707 = vmatpush1.msra.mxu0 0.0
    %708 = vmatprep.subr.mxu0 0.0
    %709 = vmatpush1.msra.mxu0 0.0
    %710 = vmatprep.subr.mxu0 0.0
    %711 = vmatpush1.msra.mxu0 0.0
    %712 = vmatprep.subr.mxu0 0.0
    %713 = vmatpush1.msra.mxu0 0.0
    %714 = vmatprep.mubr.f32.mxu0 0.0
    %v715 = vand.u32 %v79, 4294901760
    %716 = vmatmul.mubr.f32.gmra.mrb[0].mxu0 %v715
    %v717 = vpop.f32.mrb[0].mxu0
    %v718 = vadd.f32 %v631, %v717
    %v719 = vpop.f32.mrb[0].mxu0
    %720 = vdwg.mxu0
    %v721 = vmul.f32 %v61, %v61
    %722 = vmatprep.subr.mxu0 0.0
    %v723 = vand.u32 %v63, 4294901760
    %724 = vmatpush1.msra.mxu0 %v723
    %725 = vmatprep.subr.mxu0 0.0
    %v726 = vand.u32 %v64, 4294901760
    %727 = vmatpush1.msra.mxu0 %v726
    %728 = vmatprep.subr.mxu0 0.0
    %v729 = vand.u32 %v65, 4294901760
    %730 = vmatpush1.msra.mxu0 %v729
    %731 = vmatprep.subr.mxu0 0.0
    %v732 = vand.u32 %v66, 4294901760
    %733 = vmatpush1.msra.mxu0 %v732
    %734 = vmatprep.subr.mxu0 0.0
    %v735 = vand.u32 %v67, 4294901760
    %736 = vmatpush1.msra.mxu0 %v735
    %737 = vmatprep.subr.mxu0 0.0
    %v738 = vand.u32 %v68, 4294901760
    %739 = vmatpush1.msra.mxu0 %v738
    %740 = vmatprep.subr.mxu0 0.0
    %v741 = vand.u32 %v69, 4294901760
    %742 = vmatpush1.msra.mxu0 %v741
    %743 = vmatprep.subr.mxu0 0.0
    %v744 = vand.u32 %v70, 4294901760
    %745 = vmatpush1.msra.mxu0 %v744
    %746 = vmatprep.subr.mxu0 0.0
    %v747 = vand.u32 %v71, 4294901760
    %748 = vmatpush1.msra.mxu0 %v747
    %749 = vmatprep.subr.mxu0 0.0
    %v750 = vand.u32 %v72, 4294901760
    %751 = vmatpush1.msra.mxu0 %v750
    %752 = vmatprep.subr.mxu0 0.0
    %v753 = vand.u32 %v73, 4294901760
    %754 = vmatpush1.msra.mxu0 %v753
    %755 = vmatprep.subr.mxu0 0.0
    %v756 = vand.u32 %v74, 4294901760
    %757 = vmatpush1.msra.mxu0 %v756
    %758 = vmatprep.subr.mxu0 0.0
    %v759 = vand.u32 %v75, 4294901760
    %760 = vmatpush1.msra.mxu0 %v759
    %761 = vmatprep.subr.mxu0 0.0
    %v762 = vand.u32 %v76, 4294901760
    %763 = vmatpush1.msra.mxu0 %v762
    %764 = vmatprep.subr.mxu0 0.0
    %v765 = vand.u32 %v77, 4294901760
    %766 = vmatpush1.msra.mxu0 %v765
    %767 = vmatprep.subr.mxu0 0.0
    %v768 = vand.u32 %v78, 4294901760
    %769 = vmatpush1.msra.mxu0 %v768
    %770 = vmatprep.subr.mxu0 0.0
    %771 = vmatpush1.msra.mxu0 0.0
    %772 = vmatprep.subr.mxu0 0.0
    %773 = vmatpush1.msra.mxu0 0.0
    %774 = vmatprep.subr.mxu0 0.0
    %775 = vmatpush1.msra.mxu0 0.0
    %776 = vmatprep.subr.mxu0 0.0
    %777 = vmatpush1.msra.mxu0 0.0
    %778 = vmatprep.subr.mxu0 0.0
    %779 = vmatpush1.msra.mxu0 0.0
    %780 = vmatprep.subr.mxu0 0.0
    %781 = vmatpush1.msra.mxu0 0.0
    %782 = vmatprep.subr.mxu0 0.0
    %783 = vmatpush1.msra.mxu0 0.0
    %784 = vmatprep.subr.mxu0 0.0
    %785 = vmatpush1.msra.mxu0 0.0
    %786 = vmatprep.subr.mxu0 0.0
    %787 = vmatpush1.msra.mxu0 0.0
    %788 = vmatprep.subr.mxu0 0.0
    %789 = vmatpush1.msra.mxu0 0.0
    %790 = vmatprep.subr.mxu0 0.0
    %791 = vmatpush1.msra.mxu0 0.0
    %792 = vmatprep.subr.mxu0 0.0
    %793 = vmatpush1.msra.mxu0 0.0
    %794 = vmatprep.subr.mxu0 0.0
    %795 = vmatpush1.msra.mxu0 0.0
    %796 = vmatprep.subr.mxu0 0.0
    %797 = vmatpush1.msra.mxu0 0.0
    %798 = vmatprep.subr.mxu0 0.0
    %799 = vmatpush1.msra.mxu0 0.0
    %800 = vmatprep.subr.mxu0 0.0
    %801 = vmatpush1.msra.mxu0 0.0
    %802 = vmatprep.mubr.f32.mxu0 0.0
    %v803 = vand.u32 %v721, 4294901760
    %v804 = vsub.f32 %v721, %v803
    %v805 = vand.u32 %v804, 4294901760
    %v806 = vsub.f32 %v804, %v805
    %v807 = vand.u32 %v806, 4294901760
    %808 = vmatmul.mubr.f32.gmra.mrb[0].mxu0 %v807
    %v809 = vpop.f32.mrb[0].mxu0
    %v810 = vadd.f32 0.0, %v809
    %v811 = vpop.f32.mrb[0].mxu0
    %812 = vdwg.mxu0
    %813 = vmatprep.subr.mxu0 0.0
    %v814 = vand.u32 %v63, 4294901760
    %v815 = vsub.f32 %v63, %v814
    %v816 = vand.u32 %v815, 4294901760
    %v817 = vsub.f32 %v815, %v816
    %v818 = vand.u32 %v817, 4294901760
    %819 = vmatpush1.msra.mxu0 %v818
    %820 = vmatprep.subr.mxu0 0.0
    %v821 = vand.u32 %v64, 4294901760
    %v822 = vsub.f32 %v64, %v821
    %v823 = vand.u32 %v822, 4294901760
    %v824 = vsub.f32 %v822, %v823
    %v825 = vand.u32 %v824, 4294901760
    %826 = vmatpush1.msra.mxu0 %v825
    %827 = vmatprep.subr.mxu0 0.0
    %v828 = vand.u32 %v65, 4294901760
    %v829 = vsub.f32 %v65, %v828
    %v830 = vand.u32 %v829, 4294901760
    %v831 = vsub.f32 %v829, %v830
    %v832 = vand.u32 %v831, 4294901760
    %833 = vmatpush1.msra.mxu0 %v832
    %834 = vmatprep.subr.mxu0 0.0
    %v835 = vand.u32 %v66, 4294901760
    %v836 = vsub.f32 %v66, %v835
    %v837 = vand.u32 %v836, 4294901760
    %v838 = vsub.f32 %v836, %v837
    %v839 = vand.u32 %v838, 4294901760
    %840 = vmatpush1.msra.mxu0 %v839
    %841 = vmatprep.subr.mxu0 0.0
    %v842 = vand.u32 %v67, 4294901760
    %v843 = vsub.f32 %v67, %v842
    %v844 = vand.u32 %v843, 4294901760
    %v845 = vsub.f32 %v843, %v844
    %v846 = vand.u32 %v845, 4294901760
    %847 = vmatpush1.msra.mxu0 %v846
    %848 = vmatprep.subr.mxu0 0.0
    %v849 = vand.u32 %v68, 4294901760
    %v850 = vsub.f32 %v68, %v849
    %v851 = vand.u32 %v850, 4294901760
    %v852 = vsub.f32 %v850, %v851
    %v853 = vand.u32 %v852, 4294901760
    %854 = vmatpush1.msra.mxu0 %v853
    %855 = vmatprep.subr.mxu0 0.0
    %v856 = vand.u32 %v69, 4294901760
    %v857 = vsub.f32 %v69, %v856
    %v858 = vand.u32 %v857, 4294901760
    %v859 = vsub.f32 %v857, %v858
    %v860 = vand.u32 %v859, 4294901760
    %861 = vmatpush1.msra.mxu0 %v860
    %862 = vmatprep.subr.mxu0 0.0
    %v863 = vand.u32 %v70, 4294901760
    %v864 = vsub.f32 %v70, %v863
    %v865 = vand.u32 %v864, 4294901760
    %v866 = vsub.f32 %v864, %v865
    %v867 = vand.u32 %v866, 4294901760
    %868 = vmatpush1.msra.mxu0 %v867
    %869 = vmatprep.subr.mxu0 0.0
    %v870 = vand.u32 %v71, 4294901760
    %v871 = vsub.f32 %v71, %v870
    %v872 = vand.u32 %v871, 4294901760
    %v873 = vsub.f32 %v871, %v872
    %v874 = vand.u32 %v873, 4294901760
    %875 = vmatpush1.msra.mxu0 %v874
    %876 = vmatprep.subr.mxu0 0.0
    %v877 = vand.u32 %v72, 4294901760
    %v878 = vsub.f32 %v72, %v877
    %v879 = vand.u32 %v878, 4294901760
    %v880 = vsub.f32 %v878, %v879
    %v881 = vand.u32 %v880, 4294901760
    %882 = vmatpush1.msra.mxu0 %v881
    %883 = vmatprep.subr.mxu0 0.0
    %v884 = vand.u32 %v73, 4294901760
    %v885 = vsub.f32 %v73, %v884
    %v886 = vand.u32 %v885, 4294901760
    %v887 = vsub.f32 %v885, %v886
    %v888 = vand.u32 %v887, 4294901760
    %889 = vmatpush1.msra.mxu0 %v888
    %890 = vmatprep.subr.mxu0 0.0
    %v891 = vand.u32 %v74, 4294901760
    %v892 = vsub.f32 %v74, %v891
    %v893 = vand.u32 %v892, 4294901760
    %v894 = vsub.f32 %v892, %v893
    %v895 = vand.u32 %v894, 4294901760
    %896 = vmatpush1.msra.mxu0 %v895
    %897 = vmatprep.subr.mxu0 0.0
    %v898 = vand.u32 %v75, 4294901760
    %v899 = vsub.f32 %v75, %v898
    %v900 = vand.u32 %v899, 4294901760
    %v901 = vsub.f32 %v899, %v900
    %v902 = vand.u32 %v901, 4294901760
    %903 = vmatpush1.msra.mxu0 %v902
    %904 = vmatprep.subr.mxu0 0.0
    %v905 = vand.u32 %v76, 4294901760
    %v906 = vsub.f32 %v76, %v905
    %v907 = vand.u32 %v906, 4294901760
    %v908 = vsub.f32 %v906, %v907
    %v909 = vand.u32 %v908, 4294901760
    %910 = vmatpush1.msra.mxu0 %v909
    %911 = vmatprep.subr.mxu0 0.0
    %v912 = vand.u32 %v77, 4294901760
    %v913 = vsub.f32 %v77, %v912
    %v914 = vand.u32 %v913, 4294901760
    %v915 = vsub.f32 %v913, %v914
    %v916 = vand.u32 %v915, 4294901760
    %917 = vmatpush1.msra.mxu0 %v916
    %918 = vmatprep.subr.mxu0 0.0
    %v919 = vand.u32 %v78, 4294901760
    %v920 = vsub.f32 %v78, %v919
    %v921 = vand.u32 %v920, 4294901760
    %v922 = vsub.f32 %v920, %v921
    %v923 = vand.u32 %v922, 4294901760
    %924 = vmatpush1.msra.mxu0 %v923
    %925 = vmatprep.subr.mxu0 0.0
    %926 = vmatpush1.msra.mxu0 0.0
    %927 = vmatprep.subr.mxu0 0.0
    %928 = vmatpush1.msra.mxu0 0.0
    %929 = vmatprep.subr.mxu0 0.0
    %930 = vmatpush1.msra.mxu0 0.0
    %931 = vmatprep.subr.mxu0 0.0
    %932 = vmatpush1.msra.mxu0 0.0
    %933 = vmatprep.subr.mxu0 0.0
    %934 = vmatpush1.msra.mxu0 0.0
    %935 = vmatprep.subr.mxu0 0.0
    %936 = vmatpush1.msra.mxu0 0.0
    %937 = vmatprep.subr.mxu0 0.0
    %938 = vmatpush1.msra.mxu0 0.0
    %939 = vmatprep.subr.mxu0 0.0
    %940 = vmatpush1.msra.mxu0 0.0
    %941 = vmatprep.subr.mxu0 0.0
    %942 = vmatpush1.msra.mxu0 0.0
    %943 = vmatprep.subr.mxu0 0.0
    %944 = vmatpush1.msra.mxu0 0.0
    %945 = vmatprep.subr.mxu0 0.0
    %946 = vmatpush1.msra.mxu0 0.0
    %947 = vmatprep.subr.mxu0 0.0
    %948 = vmatpush1.msra.mxu0 0.0
    %949 = vmatprep.subr.mxu0 0.0
    %950 = vmatpush1.msra.mxu0 0.0
    %951 = vmatprep.subr.mxu0 0.0
    %952 = vmatpush1.msra.mxu0 0.0
    %953 = vmatprep.subr.mxu0 0.0
    %954 = vmatpush1.msra.mxu0 0.0
    %955 = vmatprep.subr.mxu0 0.0
    %956 = vmatpush1.msra.mxu0 0.0
    %957 = vmatprep.mubr.f32.mxu0 0.0
    %v958 = vand.u32 %v721, 4294901760
    %959 = vmatmul.mubr.f32.gmra.mrb[0].mxu0 %v958
    %v960 = vpop.f32.mrb[0].mxu0
    %v961 = vadd.f32 %v810, %v960
    %v962 = vpop.f32.mrb[0].mxu0
    %963 = vdwg.mxu0
    %964 = vmatprep.subr.mxu0 0.0
    %v965 = vand.u32 %v63, 4294901760
    %v966 = vsub.f32 %v63, %v965
    %967 = vmatpush1.msra.mxu0 %v966
    %968 = vmatprep.subr.mxu0 0.0
    %v969 = vand.u32 %v64, 4294901760
    %v970 = vsub.f32 %v64, %v969
    %971 = vmatpush1.msra.mxu0 %v970
    %972 = vmatprep.subr.mxu0 0.0
    %v973 = vand.u32 %v65, 4294901760
    %v974 = vsub.f32 %v65, %v973
    %975 = vmatpush1.msra.mxu0 %v974
    %976 = vmatprep.subr.mxu0 0.0
    %v977 = vand.u32 %v66, 4294901760
    %v978 = vsub.f32 %v66, %v977
    %979 = vmatpush1.msra.mxu0 %v978
    %980 = vmatprep.subr.mxu0 0.0
    %v981 = vand.u32 %v67, 4294901760
    %v982 = vsub.f32 %v67, %v981
    %983 = vmatpush1.msra.mxu0 %v982
    %984 = vmatprep.subr.mxu0 0.0
    %v985 = vand.u32 %v68, 4294901760
    %v986 = vsub.f32 %v68, %v985
    %987 = vmatpush1.msra.mxu0 %v986
    %988 = vmatprep.subr.mxu0 0.0
    %v989 = vand.u32 %v69, 4294901760
    %v990 = vsub.f32 %v69, %v989
    %991 = vmatpush1.msra.mxu0 %v990
    %992 = vmatprep.subr.mxu0 0.0
    %v993 = vand.u32 %v70, 4294901760
    %v994 = vsub.f32 %v70, %v993
    %995 = vmatpush1.msra.mxu0 %v994
    %996 = vmatprep.subr.mxu0 0.0
    %v997 = vand.u32 %v71, 4294901760
    %v998 = vsub.f32 %v71, %v997
    %999 = vmatpush1.msra.mxu0 %v998
    %1000 = vmatprep.subr.mxu0 0.0
    %v1001 = vand.u32 %v72, 4294901760
    %v1002 = vsub.f32 %v72, %v1001
    %1003 = vmatpush1.msra.mxu0 %v1002
    %1004 = vmatprep.subr.mxu0 0.0
    %v1005 = vand.u32 %v73, 4294901760
    %v1006 = vsub.f32 %v73, %v1005
    %1007 = vmatpush1.msra.mxu0 %v1006
    %1008 = vmatprep.subr.mxu0 0.0
    %v1009 = vand.u32 %v74, 4294901760
    %v1010 = vsub.f32 %v74, %v1009
    %1011 = vmatpush1.msra.mxu0 %v1010
    %1012 = vmatprep.subr.mxu0 0.0
    %v1013 = vand.u32 %v75, 4294901760
    %v1014 = vsub.f32 %v75, %v1013
    %1015 = vmatpush1.msra.mxu0 %v1014
    %1016 = vmatprep.subr.mxu0 0.0
    %v1017 = vand.u32 %v76, 4294901760
    %v1018 = vsub.f32 %v76, %v1017
    %1019 = vmatpush1.msra.mxu0 %v1018
    %1020 = vmatprep.subr.mxu0 0.0
    %v1021 = vand.u32 %v77, 4294901760
    %v1022 = vsub.f32 %v77, %v1021
    %1023 = vmatpush1.msra.mxu0 %v1022
    %1024 = vmatprep.subr.mxu0 0.0
    %v1025 = vand.u32 %v78, 4294901760
    %v1026 = vsub.f32 %v78, %v1025
    %1027 = vmatpush1.msra.mxu0 %v1026
    %1028 = vmatprep.subr.mxu0 0.0
    %1029 = vmatpush1.msra.mxu0 0.0
    %1030 = vmatprep.subr.mxu0 0.0
    %1031 = vmatpush1.msra.mxu0 0.0
    %1032 = vmatprep.subr.mxu0 0.0
    %1033 = vmatpush1.msra.mxu0 0.0
    %1034 = vmatprep.subr.mxu0 0.0
    %1035 = vmatpush1.msra.mxu0 0.0
    %1036 = vmatprep.subr.mxu0 0.0
    %1037 = vmatpush1.msra.mxu0 0.0
    %1038 = vmatprep.subr.mxu0 0.0
    %1039 = vmatpush1.msra.mxu0 0.0
    %1040 = vmatprep.subr.mxu0 0.0
    %1041 = vmatpush1.msra.mxu0 0.0
    %1042 = vmatprep.subr.mxu0 0.0
    %1043 = vmatpush1.msra.mxu0 0.0
    %1044 = vmatprep.subr.mxu0 0.0
    %1045 = vmatpush1.msra.mxu0 0.0
    %1046 = vmatprep.subr.mxu0 0.0
    %1047 = vmatpush1.msra.mxu0 0.0
    %1048 = vmatprep.subr.mxu0 0.0
    %1049 = vmatpush1.msra.mxu0 0.0
    %1050 = vmatprep.subr.mxu0 0.0
    %1051 = vmatpush1.msra.mxu0 0.0
    %1052 = vmatprep.subr.mxu0 0.0
    %1053 = vmatpush1.msra.mxu0 0.0
    %1054 = vmatprep.subr.mxu0 0.0
    %1055 = vmatpush1.msra.mxu0 0.0
    %1056 = vmatprep.subr.mxu0 0.0
    %1057 = vmatpush1.msra.mxu0 0.0
    %1058 = vmatprep.subr.mxu0 0.0
    %1059 = vmatpush1.msra.mxu0 0.0
    %1060 = vmatprep.mubr.f32.mxu0 0.0
    %v1061 = vand.u32 %v721, 4294901760
    %v1062 = vsub.f32 %v721, %v1061
    %1063 = vmatmul.mubr.f32.gmra.mrb[0].mxu0 %v1062
    %v1064 = vpop.f32.mrb[0].mxu0
    %v1065 = vadd.f32 %v961, %v1064
    %v1066 = vpop.f32.mrb[0].mxu0
    %1067 = vdwg.mxu0
    %1068 = vmatprep.subr.mxu0 0.0
    %v1069 = vand.u32 %v63, 4294901760
    %1070 = vmatpush1.msra.mxu0 %v1069
    %1071 = vmatprep.subr.mxu0 0.0
    %v1072 = vand.u32 %v64, 4294901760
    %1073 = vmatpush1.msra.mxu0 %v1072
    %1074 = vmatprep.subr.mxu0 0.0
    %v1075 = vand.u32 %v65, 4294901760
    %1076 = vmatpush1.msra.mxu0 %v1075
    %1077 = vmatprep.subr.mxu0 0.0
    %v1078 = vand.u32 %v66, 4294901760
    %1079 = vmatpush1.msra.mxu0 %v1078
    %1080 = vmatprep.subr.mxu0 0.0
    %v1081 = vand.u32 %v67, 4294901760
    %1082 = vmatpush1.msra.mxu0 %v1081
    %1083 = vmatprep.subr.mxu0 0.0
    %v1084 = vand.u32 %v68, 4294901760
    %1085 = vmatpush1.msra.mxu0 %v1084
    %1086 = vmatprep.subr.mxu0 0.0
    %v1087 = vand.u32 %v69, 4294901760
    %1088 = vmatpush1.msra.mxu0 %v1087
    %1089 = vmatprep.subr.mxu0 0.0
    %v1090 = vand.u32 %v70, 4294901760
    %1091 = vmatpush1.msra.mxu0 %v1090
    %1092 = vmatprep.subr.mxu0 0.0
    %v1093 = vand.u32 %v71, 4294901760
    %1094 = vmatpush1.msra.mxu0 %v1093
    %1095 = vmatprep.subr.mxu0 0.0
    %v1096 = vand.u32 %v72, 4294901760
    %1097 = vmatpush1.msra.mxu0 %v1096
    %1098 = vmatprep.subr.mxu0 0.0
    %v1099 = vand.u32 %v73, 4294901760
    %1100 = vmatpush1.msra.mxu0 %v1099
    %1101 = vmatprep.subr.mxu0 0.0
    %v1102 = vand.u32 %v74, 4294901760
    %1103 = vmatpush1.msra.mxu0 %v1102
    %1104 = vmatprep.subr.mxu0 0.0
    %v1105 = vand.u32 %v75, 4294901760
    %1106 = vmatpush1.msra.mxu0 %v1105
    %1107 = vmatprep.subr.mxu0 0.0
    %v1108 = vand.u32 %v76, 4294901760
    %1109 = vmatpush1.msra.mxu0 %v1108
    %1110 = vmatprep.subr.mxu0 0.0
    %v1111 = vand.u32 %v77, 4294901760
    %1112 = vmatpush1.msra.mxu0 %v1111
    %1113 = vmatprep.subr.mxu0 0.0
    %v1114 = vand.u32 %v78, 4294901760
    %1115 = vmatpush1.msra.mxu0 %v1114
    %1116 = vmatprep.subr.mxu0 0.0
    %1117 = vmatpush1.msra.mxu0 0.0
    %1118 = vmatprep.subr.mxu0 0.0
    %1119 = vmatpush1.msra.mxu0 0.0
    %1120 = vmatprep.subr.mxu0 0.0
    %1121 = vmatpush1.msra.mxu0 0.0
    %1122 = vmatprep.subr.mxu0 0.0
    %1123 = vmatpush1.msra.mxu0 0.0
    %1124 = vmatprep.subr.mxu0 0.0
    %1125 = vmatpush1.msra.mxu0 0.0
    %1126 = vmatprep.subr.mxu0 0.0
    %1127 = vmatpush1.msra.mxu0 0.0
    %1128 = vmatprep.subr.mxu0 0.0
    %1129 = vmatpush1.msra.mxu0 0.0
    %1130 = vmatprep.subr.mxu0 0.0
    %1131 = vmatpush1.msra.mxu0 0.0
    %1132 = vmatprep.subr.mxu0 0.0
    %1133 = vmatpush1.msra.mxu0 0.0
    %1134 = vmatprep.subr.mxu0 0.0
    %1135 = vmatpush1.msra.mxu0 0.0
    %1136 = vmatprep.subr.mxu0 0.0
    %1137 = vmatpush1.msra.mxu0 0.0
    %1138 = vmatprep.subr.mxu0 0.0
    %1139 = vmatpush1.msra.mxu0 0.0
    %1140 = vmatprep.subr.mxu0 0.0
    %1141 = vmatpush1.msra.mxu0 0.0
    %1142 = vmatprep.subr.mxu0 0.0
    %1143 = vmatpush1.msra.mxu0 0.0
    %1144 = vmatprep.subr.mxu0 0.0
    %1145 = vmatpush1.msra.mxu0 0.0
    %1146 = vmatprep.subr.mxu0 0.0
    %1147 = vmatpush1.msra.mxu0 0.0
    %1148 = vmatprep.mubr.f32.mxu0 0.0
    %v1149 = vand.u32 %v721, 4294901760
    %v1150 = vsub.f32 %v721, %v1149
    %v1151 = vand.u32 %v1150, 4294901760
    %1152 = vmatmul.mubr.f32.gmra.mrb[0].mxu0 %v1151
    %v1153 = vpop.f32.mrb[0].mxu0
    %v1154 = vadd.f32 %v1065, %v1153
    %v1155 = vpop.f32.mrb[0].mxu0
    %1156 = vdwg.mxu0
    %1157 = vmatprep.subr.mxu0 0.0
    %v1158 = vand.u32 %v63, 4294901760
    %v1159 = vsub.f32 %v63, %v1158
    %v1160 = vand.u32 %v1159, 4294901760
    %1161 = vmatpush1.msra.mxu0 %v1160
    %1162 = vmatprep.subr.mxu0 0.0
    %v1163 = vand.u32 %v64, 4294901760
    %v1164 = vsub.f32 %v64, %v1163
    %v1165 = vand.u32 %v1164, 4294901760
    %1166 = vmatpush1.msra.mxu0 %v1165
    %1167 = vmatprep.subr.mxu0 0.0
    %v1168 = vand.u32 %v65, 4294901760
    %v1169 = vsub.f32 %v65, %v1168
    %v1170 = vand.u32 %v1169, 4294901760
    %1171 = vmatpush1.msra.mxu0 %v1170
    %1172 = vmatprep.subr.mxu0 0.0
    %v1173 = vand.u32 %v66, 4294901760
    %v1174 = vsub.f32 %v66, %v1173
    %v1175 = vand.u32 %v1174, 4294901760
    %1176 = vmatpush1.msra.mxu0 %v1175
    %1177 = vmatprep.subr.mxu0 0.0
    %v1178 = vand.u32 %v67, 4294901760
    %v1179 = vsub.f32 %v67, %v1178
    %v1180 = vand.u32 %v1179, 4294901760
    %1181 = vmatpush1.msra.mxu0 %v1180
    %1182 = vmatprep.subr.mxu0 0.0
    %v1183 = vand.u32 %v68, 4294901760
    %v1184 = vsub.f32 %v68, %v1183
    %v1185 = vand.u32 %v1184, 4294901760
    %1186 = vmatpush1.msra.mxu0 %v1185
    %1187 = vmatprep.subr.mxu0 0.0
    %v1188 = vand.u32 %v69, 4294901760
    %v1189 = vsub.f32 %v69, %v1188
    %v1190 = vand.u32 %v1189, 4294901760
    %1191 = vmatpush1.msra.mxu0 %v1190
    %1192 = vmatprep.subr.mxu0 0.0
    %v1193 = vand.u32 %v70, 4294901760
    %v1194 = vsub.f32 %v70, %v1193
    %v1195 = vand.u32 %v1194, 4294901760
    %1196 = vmatpush1.msra.mxu0 %v1195
    %1197 = vmatprep.subr.mxu0 0.0
    %v1198 = vand.u32 %v71, 4294901760
    %v1199 = vsub.f32 %v71, %v1198
    %v1200 = vand.u32 %v1199, 4294901760
    %1201 = vmatpush1.msra.mxu0 %v1200
    %1202 = vmatprep.subr.mxu0 0.0
    %v1203 = vand.u32 %v72, 4294901760
    %v1204 = vsub.f32 %v72, %v1203
    %v1205 = vand.u32 %v1204, 4294901760
    %1206 = vmatpush1.msra.mxu0 %v1205
    %1207 = vmatprep.subr.mxu0 0.0
    %v1208 = vand.u32 %v73, 4294901760
    %v1209 = vsub.f32 %v73, %v1208
    %v1210 = vand.u32 %v1209, 4294901760
    %1211 = vmatpush1.msra.mxu0 %v1210
    %1212 = vmatprep.subr.mxu0 0.0
    %v1213 = vand.u32 %v74, 4294901760
    %v1214 = vsub.f32 %v74, %v1213
    %v1215 = vand.u32 %v1214, 4294901760
    %1216 = vmatpush1.msra.mxu0 %v1215
    %1217 = vmatprep.subr.mxu0 0.0
    %v1218 = vand.u32 %v75, 4294901760
    %v1219 = vsub.f32 %v75, %v1218
    %v1220 = vand.u32 %v1219, 4294901760
    %1221 = vmatpush1.msra.mxu0 %v1220
    %1222 = vmatprep.subr.mxu0 0.0
    %v1223 = vand.u32 %v76, 4294901760
    %v1224 = vsub.f32 %v76, %v1223
    %v1225 = vand.u32 %v1224, 4294901760
    %1226 = vmatpush1.msra.mxu0 %v1225
    %1227 = vmatprep.subr.mxu0 0.0
    %v1228 = vand.u32 %v77, 4294901760
    %v1229 = vsub.f32 %v77, %v1228
    %v1230 = vand.u32 %v1229, 4294901760
    %1231 = vmatpush1.msra.mxu0 %v1230
    %1232 = vmatprep.subr.mxu0 0.0
    %v1233 = vand.u32 %v78, 4294901760
    %v1234 = vsub.f32 %v78, %v1233
    %v1235 = vand.u32 %v1234, 4294901760
    %1236 = vmatpush1.msra.mxu0 %v1235
    %1237 = vmatprep.subr.mxu0 0.0
    %1238 = vmatpush1.msra.mxu0 0.0
    %1239 = vmatprep.subr.mxu0 0.0
    %1240 = vmatpush1.msra.mxu0 0.0
    %1241 = vmatprep.subr.mxu0 0.0
    %1242 = vmatpush1.msra.mxu0 0.0
    %1243 = vmatprep.subr.mxu0 0.0
    %1244 = vmatpush1.msra.mxu0 0.0
    %1245 = vmatprep.subr.mxu0 0.0
    %1246 = vmatpush1.msra.mxu0 0.0
    %1247 = vmatprep.subr.mxu0 0.0
    %1248 = vmatpush1.msra.mxu0 0.0
    %1249 = vmatprep.subr.mxu0 0.0
    %1250 = vmatpush1.msra.mxu0 0.0
    %1251 = vmatprep.subr.mxu0 0.0
    %1252 = vmatpush1.msra.mxu0 0.0
    %1253 = vmatprep.subr.mxu0 0.0
    %1254 = vmatpush1.msra.mxu0 0.0
    %1255 = vmatprep.subr.mxu0 0.0
    %1256 = vmatpush1.msra.mxu0 0.0
    %1257 = vmatprep.subr.mxu0 0.0
    %1258 = vmatpush1.msra.mxu0 0.0
    %1259 = vmatprep.subr.mxu0 0.0
    %1260 = vmatpush1.msra.mxu0 0.0
    %1261 = vmatprep.subr.mxu0 0.0
    %1262 = vmatpush1.msra.mxu0 0.0
    %1263 = vmatprep.subr.mxu0 0.0
    %1264 = vmatpush1.msra.mxu0 0.0
    %1265 = vmatprep.subr.mxu0 0.0
    %1266 = vmatpush1.msra.mxu0 0.0
    %1267 = vmatprep.subr.mxu0 0.0
    %1268 = vmatpush1.msra.mxu0 0.0
    %1269 = vmatprep.mubr.f32.mxu0 0.0
    %v1270 = vand.u32 %v721, 4294901760
    %1271 = vmatmul.mubr.f32.gmra.mrb[0].mxu0 %v1270
    %v1272 = vpop.f32.mrb[0].mxu0
    %v1273 = vadd.f32 %v1154, %v1272
    %v1274 = vpop.f32.mrb[0].mxu0
    %1275 = vdwg.mxu0
    %1276 = vmatprep.subr.mxu0 0.0
    %v1277 = vand.u32 %v63, 4294901760
    %1278 = vmatpush1.msra.mxu0 %v1277
    %1279 = vmatprep.subr.mxu0 0.0
    %v1280 = vand.u32 %v64, 4294901760
    %1281 = vmatpush1.msra.mxu0 %v1280
    %1282 = vmatprep.subr.mxu0 0.0
    %v1283 = vand.u32 %v65, 4294901760
    %1284 = vmatpush1.msra.mxu0 %v1283
    %1285 = vmatprep.subr.mxu0 0.0
    %v1286 = vand.u32 %v66, 4294901760
    %1287 = vmatpush1.msra.mxu0 %v1286
    %1288 = vmatprep.subr.mxu0 0.0
    %v1289 = vand.u32 %v67, 4294901760
    %1290 = vmatpush1.msra.mxu0 %v1289
    %1291 = vmatprep.subr.mxu0 0.0
    %v1292 = vand.u32 %v68, 4294901760
    %1293 = vmatpush1.msra.mxu0 %v1292
    %1294 = vmatprep.subr.mxu0 0.0
    %v1295 = vand.u32 %v69, 4294901760
    %1296 = vmatpush1.msra.mxu0 %v1295
    %1297 = vmatprep.subr.mxu0 0.0
    %v1298 = vand.u32 %v70, 4294901760
    %1299 = vmatpush1.msra.mxu0 %v1298
    %1300 = vmatprep.subr.mxu0 0.0
    %v1301 = vand.u32 %v71, 4294901760
    %1302 = vmatpush1.msra.mxu0 %v1301
    %1303 = vmatprep.subr.mxu0 0.0
    %v1304 = vand.u32 %v72, 4294901760
    %1305 = vmatpush1.msra.mxu0 %v1304
    %1306 = vmatprep.subr.mxu0 0.0
    %v1307 = vand.u32 %v73, 4294901760
    %1308 = vmatpush1.msra.mxu0 %v1307
    %1309 = vmatprep.subr.mxu0 0.0
    %v1310 = vand.u32 %v74, 4294901760
    %1311 = vmatpush1.msra.mxu0 %v1310
    %1312 = vmatprep.subr.mxu0 0.0
    %v1313 = vand.u32 %v75, 4294901760
    %1314 = vmatpush1.msra.mxu0 %v1313
    %1315 = vmatprep.subr.mxu0 0.0
    %v1316 = vand.u32 %v76, 4294901760
    %1317 = vmatpush1.msra.mxu0 %v1316
    %1318 = vmatprep.subr.mxu0 0.0
    %v1319 = vand.u32 %v77, 4294901760
    %1320 = vmatpush1.msra.mxu0 %v1319
    %1321 = vmatprep.subr.mxu0 0.0
    %v1322 = vand.u32 %v78, 4294901760
    %1323 = vmatpush1.msra.mxu0 %v1322
    %1324 = vmatprep.subr.mxu0 0.0
    %1325 = vmatpush1.msra.mxu0 0.0
    %1326 = vmatprep.subr.mxu0 0.0
    %1327 = vmatpush1.msra.mxu0 0.0
    %1328 = vmatprep.subr.mxu0 0.0
    %1329 = vmatpush1.msra.mxu0 0.0
    %1330 = vmatprep.subr.mxu0 0.0
    %1331 = vmatpush1.msra.mxu0 0.0
    %1332 = vmatprep.subr.mxu0 0.0
    %1333 = vmatpush1.msra.mxu0 0.0
    %1334 = vmatprep.subr.mxu0 0.0
    %1335 = vmatpush1.msra.mxu0 0.0
    %1336 = vmatprep.subr.mxu0 0.0
    %1337 = vmatpush1.msra.mxu0 0.0
    %1338 = vmatprep.subr.mxu0 0.0
    %1339 = vmatpush1.msra.mxu0 0.0
    %1340 = vmatprep.subr.mxu0 0.0
    %1341 = vmatpush1.msra.mxu0 0.0
    %1342 = vmatprep.subr.mxu0 0.0
    %1343 = vmatpush1.msra.mxu0 0.0
    %1344 = vmatprep.subr.mxu0 0.0
    %1345 = vmatpush1.msra.mxu0 0.0
    %1346 = vmatprep.subr.mxu0 0.0
    %1347 = vmatpush1.msra.mxu0 0.0
    %1348 = vmatprep.subr.mxu0 0.0
    %1349 = vmatpush1.msra.mxu0 0.0
    %1350 = vmatprep.subr.mxu0 0.0
    %1351 = vmatpush1.msra.mxu0 0.0
    %1352 = vmatprep.subr.mxu0 0.0
    %1353 = vmatpush1.msra.mxu0 0.0
    %1354 = vmatprep.subr.mxu0 0.0
    %1355 = vmatpush1.msra.mxu0 0.0
    %1356 = vmatprep.mubr.f32.mxu0 0.0
    %v1357 = vand.u32 %v721, 4294901760
    %1358 = vmatmul.mubr.f32.gmra.mrb[0].mxu0 %v1357
    %v1359 = vpop.f32.mrb[0].mxu0
    %v1360 = vadd.f32 %v1273, %v1359
    %v1361 = vpop.f32.mrb[0].mxu0
    %1362 = vdwg.mxu0
    %v1363 = vmul.f32 %v62, %v62
    %1364 = vmatprep.subr.mxu0 0.0
    %v1365 = vand.u32 %v63, 4294901760
    %1366 = vmatpush1.msra.mxu0 %v1365
    %1367 = vmatprep.subr.mxu0 0.0
    %v1368 = vand.u32 %v64, 4294901760
    %1369 = vmatpush1.msra.mxu0 %v1368
    %1370 = vmatprep.subr.mxu0 0.0
    %v1371 = vand.u32 %v65, 4294901760
    %1372 = vmatpush1.msra.mxu0 %v1371
    %1373 = vmatprep.subr.mxu0 0.0
    %v1374 = vand.u32 %v66, 4294901760
    %1375 = vmatpush1.msra.mxu0 %v1374
    %1376 = vmatprep.subr.mxu0 0.0
    %v1377 = vand.u32 %v67, 4294901760
    %1378 = vmatpush1.msra.mxu0 %v1377
    %1379 = vmatprep.subr.mxu0 0.0
    %v1380 = vand.u32 %v68, 4294901760
    %1381 = vmatpush1.msra.mxu0 %v1380
    %1382 = vmatprep.subr.mxu0 0.0
    %v1383 = vand.u32 %v69, 4294901760
    %1384 = vmatpush1.msra.mxu0 %v1383
    %1385 = vmatprep.subr.mxu0 0.0
    %v1386 = vand.u32 %v70, 4294901760
    %1387 = vmatpush1.msra.mxu0 %v1386
    %1388 = vmatprep.subr.mxu0 0.0
    %v1389 = vand.u32 %v71, 4294901760
    %1390 = vmatpush1.msra.mxu0 %v1389
    %1391 = vmatprep.subr.mxu0 0.0
    %v1392 = vand.u32 %v72, 4294901760
    %1393 = vmatpush1.msra.mxu0 %v1392
    %1394 = vmatprep.subr.mxu0 0.0
    %v1395 = vand.u32 %v73, 4294901760
    %1396 = vmatpush1.msra.mxu0 %v1395
    %1397 = vmatprep.subr.mxu0 0.0
    %v1398 = vand.u32 %v74, 4294901760
    %1399 = vmatpush1.msra.mxu0 %v1398
    %1400 = vmatprep.subr.mxu0 0.0
    %v1401 = vand.u32 %v75, 4294901760
    %1402 = vmatpush1.msra.mxu0 %v1401
    %1403 = vmatprep.subr.mxu0 0.0
    %v1404 = vand.u32 %v76, 4294901760
    %1405 = vmatpush1.msra.mxu0 %v1404
    %1406 = vmatprep.subr.mxu0 0.0
    %v1407 = vand.u32 %v77, 4294901760
    %1408 = vmatpush1.msra.mxu0 %v1407
    %1409 = vmatprep.subr.mxu0 0.0
    %v1410 = vand.u32 %v78, 4294901760
    %1411 = vmatpush1.msra.mxu0 %v1410
    %1412 = vmatprep.subr.mxu0 0.0
    %1413 = vmatpush1.msra.mxu0 0.0
    %1414 = vmatprep.subr.mxu0 0.0
    %1415 = vmatpush1.msra.mxu0 0.0
    %1416 = vmatprep.subr.mxu0 0.0
    %1417 = vmatpush1.msra.mxu0 0.0
    %1418 = vmatprep.subr.mxu0 0.0
    %1419 = vmatpush1.msra.mxu0 0.0
    %1420 = vmatprep.subr.mxu0 0.0
    %1421 = vmatpush1.msra.mxu0 0.0
    %1422 = vmatprep.subr.mxu0 0.0
    %1423 = vmatpush1.msra.mxu0 0.0
    %1424 = vmatprep.subr.mxu0 0.0
    %1425 = vmatpush1.msra.mxu0 0.0
    %1426 = vmatprep.subr.mxu0 0.0
    %1427 = vmatpush1.msra.mxu0 0.0
    %1428 = vmatprep.subr.mxu0 0.0
    %1429 = vmatpush1.msra.mxu0 0.0
    %1430 = vmatprep.subr.mxu0 0.0
    %1431 = vmatpush1.msra.mxu0 0.0
    %1432 = vmatprep.subr.mxu0 0.0
    %1433 = vmatpush1.msra.mxu0 0.0
    %1434 = vmatprep.subr.mxu0 0.0
    %1435 = vmatpush1.msra.mxu0 0.0
    %1436 = vmatprep.subr.mxu0 0.0
    %1437 = vmatpush1.msra.mxu0 0.0
    %1438 = vmatprep.subr.mxu0 0.0
    %1439 = vmatpush1.msra.mxu0 0.0
    %1440 = vmatprep.subr.mxu0 0.0
    %1441 = vmatpush1.msra.mxu0 0.0
    %1442 = vmatprep.subr.mxu0 0.0
    %1443 = vmatpush1.msra.mxu0 0.0
    %1444 = vmatprep.mubr.f32.mxu0 0.0
    %v1445 = vand.u32 %v1363, 4294901760
    %v1446 = vsub.f32 %v1363, %v1445
    %v1447 = vand.u32 %v1446, 4294901760
    %v1448 = vsub.f32 %v1446, %v1447
    %v1449 = vand.u32 %v1448, 4294901760
    %1450 = vmatmul.mubr.f32.gmra.mrb[0].mxu0 %v1449
    %v1451 = vpop.f32.mrb[0].mxu0
    %v1452 = vadd.f32 0.0, %v1451
    %v1453 = vpop.f32.mrb[0].mxu0
    %1454 = vdwg.mxu0
    %1455 = vmatprep.subr.mxu0 0.0
    %v1456 = vand.u32 %v63, 4294901760
    %v1457 = vsub.f32 %v63, %v1456
    %v1458 = vand.u32 %v1457, 4294901760
    %v1459 = vsub.f32 %v1457, %v1458
    %v1460 = vand.u32 %v1459, 4294901760
    %1461 = vmatpush1.msra.mxu0 %v1460
    %1462 = vmatprep.subr.mxu0 0.0
    %v1463 = vand.u32 %v64, 4294901760
    %v1464 = vsub.f32 %v64, %v1463
    %v1465 = vand.u32 %v1464, 4294901760
    %v1466 = vsub.f32 %v1464, %v1465
    %v1467 = vand.u32 %v1466, 4294901760
    %1468 = vmatpush1.msra.mxu0 %v1467
    %1469 = vmatprep.subr.mxu0 0.0
    %v1470 = vand.u32 %v65, 4294901760
    %v1471 = vsub.f32 %v65, %v1470
    %v1472 = vand.u32 %v1471, 4294901760
    %v1473 = vsub.f32 %v1471, %v1472
    %v1474 = vand.u32 %v1473, 4294901760
    %1475 = vmatpush1.msra.mxu0 %v1474
    %1476 = vmatprep.subr.mxu0 0.0
    %v1477 = vand.u32 %v66, 4294901760
    %v1478 = vsub.f32 %v66, %v1477
    %v1479 = vand.u32 %v1478, 4294901760
    %v1480 = vsub.f32 %v1478, %v1479
    %v1481 = vand.u32 %v1480, 4294901760
    %1482 = vmatpush1.msra.mxu0 %v1481
    %1483 = vmatprep.subr.mxu0 0.0
    %v1484 = vand.u32 %v67, 4294901760
    %v1485 = vsub.f32 %v67, %v1484
    %v1486 = vand.u32 %v1485, 4294901760
    %v1487 = vsub.f32 %v1485, %v1486
    %v1488 = vand.u32 %v1487, 4294901760
    %1489 = vmatpush1.msra.mxu0 %v1488
    %1490 = vmatprep.subr.mxu0 0.0
    %v1491 = vand.u32 %v68, 4294901760
    %v1492 = vsub.f32 %v68, %v1491
    %v1493 = vand.u32 %v1492, 4294901760
    %v1494 = vsub.f32 %v1492, %v1493
    %v1495 = vand.u32 %v1494, 4294901760
    %1496 = vmatpush1.msra.mxu0 %v1495
    %1497 = vmatprep.subr.mxu0 0.0
    %v1498 = vand.u32 %v69, 4294901760
    %v1499 = vsub.f32 %v69, %v1498
    %v1500 = vand.u32 %v1499, 4294901760
    %v1501 = vsub.f32 %v1499, %v1500
    %v1502 = vand.u32 %v1501, 4294901760
    %1503 = vmatpush1.msra.mxu0 %v1502
    %1504 = vmatprep.subr.mxu0 0.0
    %v1505 = vand.u32 %v70, 4294901760
    %v1506 = vsub.f32 %v70, %v1505
    %v1507 = vand.u32 %v1506, 4294901760
    %v1508 = vsub.f32 %v1506, %v1507
    %v1509 = vand.u32 %v1508, 4294901760
    %1510 = vmatpush1.msra.mxu0 %v1509
    %1511 = vmatprep.subr.mxu0 0.0
    %v1512 = vand.u32 %v71, 4294901760
    %v1513 = vsub.f32 %v71, %v1512
    %v1514 = vand.u32 %v1513, 4294901760
    %v1515 = vsub.f32 %v1513, %v1514
    %v1516 = vand.u32 %v1515, 4294901760
    %1517 = vmatpush1.msra.mxu0 %v1516
    %1518 = vmatprep.subr.mxu0 0.0
    %v1519 = vand.u32 %v72, 4294901760
    %v1520 = vsub.f32 %v72, %v1519
    %v1521 = vand.u32 %v1520, 4294901760
    %v1522 = vsub.f32 %v1520, %v1521
    %v1523 = vand.u32 %v1522, 4294901760
    %1524 = vmatpush1.msra.mxu0 %v1523
    %1525 = vmatprep.subr.mxu0 0.0
    %v1526 = vand.u32 %v73, 4294901760
    %v1527 = vsub.f32 %v73, %v1526
    %v1528 = vand.u32 %v1527, 4294901760
    %v1529 = vsub.f32 %v1527, %v1528
    %v1530 = vand.u32 %v1529, 4294901760
    %1531 = vmatpush1.msra.mxu0 %v1530
    %1532 = vmatprep.subr.mxu0 0.0
    %v1533 = vand.u32 %v74, 4294901760
    %v1534 = vsub.f32 %v74, %v1533
    %v1535 = vand.u32 %v1534, 4294901760
    %v1536 = vsub.f32 %v1534, %v1535
    %v1537 = vand.u32 %v1536, 4294901760
    %1538 = vmatpush1.msra.mxu0 %v1537
    %1539 = vmatprep.subr.mxu0 0.0
    %v1540 = vand.u32 %v75, 4294901760
    %v1541 = vsub.f32 %v75, %v1540
    %v1542 = vand.u32 %v1541, 4294901760
    %v1543 = vsub.f32 %v1541, %v1542
    %v1544 = vand.u32 %v1543, 4294901760
    %1545 = vmatpush1.msra.mxu0 %v1544
    %1546 = vmatprep.subr.mxu0 0.0
    %v1547 = vand.u32 %v76, 4294901760
    %v1548 = vsub.f32 %v76, %v1547
    %v1549 = vand.u32 %v1548, 4294901760
    %v1550 = vsub.f32 %v1548, %v1549
    %v1551 = vand.u32 %v1550, 4294901760
    %1552 = vmatpush1.msra.mxu0 %v1551
    %1553 = vmatprep.subr.mxu0 0.0
    %v1554 = vand.u32 %v77, 4294901760
    %v1555 = vsub.f32 %v77, %v1554
    %v1556 = vand.u32 %v1555, 4294901760
    %v1557 = vsub.f32 %v1555, %v1556
    %v1558 = vand.u32 %v1557, 4294901760
    %1559 = vmatpush1.msra.mxu0 %v1558
    %1560 = vmatprep.subr.mxu0 0.0
    %v1561 = vand.u32 %v78, 4294901760
    %v1562 = vsub.f32 %v78, %v1561
    %v1563 = vand.u32 %v1562, 4294901760
    %v1564 = vsub.f32 %v1562, %v1563
    %v1565 = vand.u32 %v1564, 4294901760
    %1566 = vmatpush1.msra.mxu0 %v1565
    %1567 = vmatprep.subr.mxu0 0.0
    %1568 = vmatpush1.msra.mxu0 0.0
    %1569 = vmatprep.subr.mxu0 0.0
    %1570 = vmatpush1.msra.mxu0 0.0
    %1571 = vmatprep.subr.mxu0 0.0
    %1572 = vmatpush1.msra.mxu0 0.0
    %1573 = vmatprep.subr.mxu0 0.0
    %1574 = vmatpush1.msra.mxu0 0.0
    %1575 = vmatprep.subr.mxu0 0.0
    %1576 = vmatpush1.msra.mxu0 0.0
    %1577 = vmatprep.subr.mxu0 0.0
    %1578 = vmatpush1.msra.mxu0 0.0
    %1579 = vmatprep.subr.mxu0 0.0
    %1580 = vmatpush1.msra.mxu0 0.0
    %1581 = vmatprep.subr.mxu0 0.0
    %1582 = vmatpush1.msra.mxu0 0.0
    %1583 = vmatprep.subr.mxu0 0.0
    %1584 = vmatpush1.msra.mxu0 0.0
    %1585 = vmatprep.subr.mxu0 0.0
    %1586 = vmatpush1.msra.mxu0 0.0
    %1587 = vmatprep.subr.mxu0 0.0
    %1588 = vmatpush1.msra.mxu0 0.0
    %1589 = vmatprep.subr.mxu0 0.0
    %1590 = vmatpush1.msra.mxu0 0.0
    %1591 = vmatprep.subr.mxu0 0.0
    %1592 = vmatpush1.msra.mxu0 0.0
    %1593 = vmatprep.subr.mxu0 0.0
    %1594 = vmatpush1.msra.mxu0 0.0
    %1595 = vmatprep.subr.mxu0 0.0
    %1596 = vmatpush1.msra.mxu0 0.0
    %1597 = vmatprep.subr.mxu0 0.0
    %1598 = vmatpush1.msra.mxu0 0.0
    %1599 = vmatprep.mubr.f32.mxu0 0.0
    %v1600 = vand.u32 %v1363, 4294901760
    %1601 = vmatmul.mubr.f32.gmra.mrb[0].mxu0 %v1600
    %v1602 = vpop.f32.mrb[0].mxu0
    %v1603 = vadd.f32 %v1452, %v1602
    %v1604 = vpop.f32.mrb[0].mxu0
    %1605 = vdwg.mxu0
    %1606 = vmatprep.subr.mxu0 0.0
    %v1607 = vand.u32 %v63, 4294901760
    %v1608 = vsub.f32 %v63, %v1607
    %1609 = vmatpush1.msra.mxu0 %v1608
    %1610 = vmatprep.subr.mxu0 0.0
    %v1611 = vand.u32 %v64, 4294901760
    %v1612 = vsub.f32 %v64, %v1611
    %1613 = vmatpush1.msra.mxu0 %v1612
    %1614 = vmatprep.subr.mxu0 0.0
    %v1615 = vand.u32 %v65, 4294901760
    %v1616 = vsub.f32 %v65, %v1615
    %1617 = vmatpush1.msra.mxu0 %v1616
    %1618 = vmatprep.subr.mxu0 0.0
    %v1619 = vand.u32 %v66, 4294901760
    %v1620 = vsub.f32 %v66, %v1619
    %1621 = vmatpush1.msra.mxu0 %v1620
    %1622 = vmatprep.subr.mxu0 0.0
    %v1623 = vand.u32 %v67, 4294901760
    %v1624 = vsub.f32 %v67, %v1623
    %1625 = vmatpush1.msra.mxu0 %v1624
    %1626 = vmatprep.subr.mxu0 0.0
    %v1627 = vand.u32 %v68, 4294901760
    %v1628 = vsub.f32 %v68, %v1627
    %1629 = vmatpush1.msra.mxu0 %v1628
    %1630 = vmatprep.subr.mxu0 0.0
    %v1631 = vand.u32 %v69, 4294901760
    %v1632 = vsub.f32 %v69, %v1631
    %1633 = vmatpush1.msra.mxu0 %v1632
    %1634 = vmatprep.subr.mxu0 0.0
    %v1635 = vand.u32 %v70, 4294901760
    %v1636 = vsub.f32 %v70, %v1635
    %1637 = vmatpush1.msra.mxu0 %v1636
    %1638 = vmatprep.subr.mxu0 0.0
    %v1639 = vand.u32 %v71, 4294901760
    %v1640 = vsub.f32 %v71, %v1639
    %1641 = vmatpush1.msra.mxu0 %v1640
    %1642 = vmatprep.subr.mxu0 0.0
    %v1643 = vand.u32 %v72, 4294901760
    %v1644 = vsub.f32 %v72, %v1643
    %1645 = vmatpush1.msra.mxu0 %v1644
    %1646 = vmatprep.subr.mxu0 0.0
    %v1647 = vand.u32 %v73, 4294901760
    %v1648 = vsub.f32 %v73, %v1647
    %1649 = vmatpush1.msra.mxu0 %v1648
    %1650 = vmatprep.subr.mxu0 0.0
    %v1651 = vand.u32 %v74, 4294901760
    %v1652 = vsub.f32 %v74, %v1651
    %1653 = vmatpush1.msra.mxu0 %v1652
    %1654 = vmatprep.subr.mxu0 0.0
    %v1655 = vand.u32 %v75, 4294901760
    %v1656 = vsub.f32 %v75, %v1655
    %1657 = vmatpush1.msra.mxu0 %v1656
    %1658 = vmatprep.subr.mxu0 0.0
    %v1659 = vand.u32 %v76, 4294901760
    %v1660 = vsub.f32 %v76, %v1659
    %1661 = vmatpush1.msra.mxu0 %v1660
    %1662 = vmatprep.subr.mxu0 0.0
    %v1663 = vand.u32 %v77, 4294901760
    %v1664 = vsub.f32 %v77, %v1663
    %1665 = vmatpush1.msra.mxu0 %v1664
    %1666 = vmatprep.subr.mxu0 0.0
    %v1667 = vand.u32 %v78, 4294901760
    %v1668 = vsub.f32 %v78, %v1667
    %1669 = vmatpush1.msra.mxu0 %v1668
    %1670 = vmatprep.subr.mxu0 0.0
    %1671 = vmatpush1.msra.mxu0 0.0
    %1672 = vmatprep.subr.mxu0 0.0
    %1673 = vmatpush1.msra.mxu0 0.0
    %1674 = vmatprep.subr.mxu0 0.0
    %1675 = vmatpush1.msra.mxu0 0.0
    %1676 = vmatprep.subr.mxu0 0.0
    %1677 = vmatpush1.msra.mxu0 0.0
    %1678 = vmatprep.subr.mxu0 0.0
    %1679 = vmatpush1.msra.mxu0 0.0
    %1680 = vmatprep.subr.mxu0 0.0
    %1681 = vmatpush1.msra.mxu0 0.0
    %1682 = vmatprep.subr.mxu0 0.0
    %1683 = vmatpush1.msra.mxu0 0.0
    %1684 = vmatprep.subr.mxu0 0.0
    %1685 = vmatpush1.msra.mxu0 0.0
    %1686 = vmatprep.subr.mxu0 0.0
    %1687 = vmatpush1.msra.mxu0 0.0
    %1688 = vmatprep.subr.mxu0 0.0
    %1689 = vmatpush1.msra.mxu0 0.0
    %1690 = vmatprep.subr.mxu0 0.0
    %1691 = vmatpush1.msra.mxu0 0.0
    %1692 = vmatprep.subr.mxu0 0.0
    %1693 = vmatpush1.msra.mxu0 0.0
    %1694 = vmatprep.subr.mxu0 0.0
    %1695 = vmatpush1.msra.mxu0 0.0
    %1696 = vmatprep.subr.mxu0 0.0
    %1697 = vmatpush1.msra.mxu0 0.0
    %1698 = vmatprep.subr.mxu0 0.0
    %1699 = vmatpush1.msra.mxu0 0.0
    %1700 = vmatprep.subr.mxu0 0.0
    %1701 = vmatpush1.msra.mxu0 0.0
    %1702 = vmatprep.mubr.f32.mxu0 0.0
    %v1703 = vand.u32 %v1363, 4294901760
    %v1704 = vsub.f32 %v1363, %v1703
    %1705 = vmatmul.mubr.f32.gmra.mrb[0].mxu0 %v1704
    %v1706 = vpop.f32.mrb[0].mxu0
    %v1707 = vadd.f32 %v1603, %v1706
    %v1708 = vpop.f32.mrb[0].mxu0
    %1709 = vdwg.mxu0
    %1710 = vmatprep.subr.mxu0 0.0
    %v1711 = vand.u32 %v63, 4294901760
    %1712 = vmatpush1.msra.mxu0 %v1711
    %1713 = vmatprep.subr.mxu0 0.0
    %v1714 = vand.u32 %v64, 4294901760
    %1715 = vmatpush1.msra.mxu0 %v1714
    %1716 = vmatprep.subr.mxu0 0.0
    %v1717 = vand.u32 %v65, 4294901760
    %1718 = vmatpush1.msra.mxu0 %v1717
    %1719 = vmatprep.subr.mxu0 0.0
    %v1720 = vand.u32 %v66, 4294901760
    %1721 = vmatpush1.msra.mxu0 %v1720
    %1722 = vmatprep.subr.mxu0 0.0
    %v1723 = vand.u32 %v67, 4294901760
    %1724 = vmatpush1.msra.mxu0 %v1723
    %1725 = vmatprep.subr.mxu0 0.0
    %v1726 = vand.u32 %v68, 4294901760
    %1727 = vmatpush1.msra.mxu0 %v1726
    %1728 = vmatprep.subr.mxu0 0.0
    %v1729 = vand.u32 %v69, 4294901760
    %1730 = vmatpush1.msra.mxu0 %v1729
    %1731 = vmatprep.subr.mxu0 0.0
    %v1732 = vand.u32 %v70, 4294901760
    %1733 = vmatpush1.msra.mxu0 %v1732
    %1734 = vmatprep.subr.mxu0 0.0
    %v1735 = vand.u32 %v71, 4294901760
    %1736 = vmatpush1.msra.mxu0 %v1735
    %1737 = vmatprep.subr.mxu0 0.0
    %v1738 = vand.u32 %v72, 4294901760
    %1739 = vmatpush1.msra.mxu0 %v1738
    %1740 = vmatprep.subr.mxu0 0.0
    %v1741 = vand.u32 %v73, 4294901760
    %1742 = vmatpush1.msra.mxu0 %v1741
    %1743 = vmatprep.subr.mxu0 0.0
    %v1744 = vand.u32 %v74, 4294901760
    %1745 = vmatpush1.msra.mxu0 %v1744
    %1746 = vmatprep.subr.mxu0 0.0
    %v1747 = vand.u32 %v75, 4294901760
    %1748 = vmatpush1.msra.mxu0 %v1747
    %1749 = vmatprep.subr.mxu0 0.0
    %v1750 = vand.u32 %v76, 4294901760
    %1751 = vmatpush1.msra.mxu0 %v1750
    %1752 = vmatprep.subr.mxu0 0.0
    %v1753 = vand.u32 %v77, 4294901760
    %1754 = vmatpush1.msra.mxu0 %v1753
    %1755 = vmatprep.subr.mxu0 0.0
    %v1756 = vand.u32 %v78, 4294901760
    %1757 = vmatpush1.msra.mxu0 %v1756
    %1758 = vmatprep.subr.mxu0 0.0
    %1759 = vmatpush1.msra.mxu0 0.0
    %1760 = vmatprep.subr.mxu0 0.0
    %1761 = vmatpush1.msra.mxu0 0.0
    %1762 = vmatprep.subr.mxu0 0.0
    %1763 = vmatpush1.msra.mxu0 0.0
    %1764 = vmatprep.subr.mxu0 0.0
    %1765 = vmatpush1.msra.mxu0 0.0
    %1766 = vmatprep.subr.mxu0 0.0
    %1767 = vmatpush1.msra.mxu0 0.0
    %1768 = vmatprep.subr.mxu0 0.0
    %1769 = vmatpush1.msra.mxu0 0.0
    %1770 = vmatprep.subr.mxu0 0.0
    %1771 = vmatpush1.msra.mxu0 0.0
    %1772 = vmatprep.subr.mxu0 0.0
    %1773 = vmatpush1.msra.mxu0 0.0
    %1774 = vmatprep.subr.mxu0 0.0
    %1775 = vmatpush1.msra.mxu0 0.0
    %1776 = vmatprep.subr.mxu0 0.0
    %1777 = vmatpush1.msra.mxu0 0.0
    %1778 = vmatprep.subr.mxu0 0.0
    %1779 = vmatpush1.msra.mxu0 0.0
    %1780 = vmatprep.subr.mxu0 0.0
    %1781 = vmatpush1.msra.mxu0 0.0
    %1782 = vmatprep.subr.mxu0 0.0
    %1783 = vmatpush1.msra.mxu0 0.0
    %1784 = vmatprep.subr.mxu0 0.0
    %1785 = vmatpush1.msra.mxu0 0.0
    %1786 = vmatprep.subr.mxu0 0.0
    %1787 = vmatpush1.msra.mxu0 0.0
    %1788 = vmatprep.subr.mxu0 0.0
    %1789 = vmatpush1.msra.mxu0 0.0
    %1790 = vmatprep.mubr.f32.mxu0 0.0
    %v1791 = vand.u32 %v1363, 4294901760
    %v1792 = vsub.f32 %v1363, %v1791
    %v1793 = vand.u32 %v1792, 4294901760
    %1794 = vmatmul.mubr.f32.gmra.mrb[0].mxu0 %v1793
    %v1795 = vpop.f32.mrb[0].mxu0
    %v1796 = vadd.f32 %v1707, %v1795
    %v1797 = vpop.f32.mrb[0].mxu0
    %1798 = vdwg.mxu0
    %1799 = vmatprep.subr.mxu0 0.0
    %v1800 = vand.u32 %v63, 4294901760
    %v1801 = vsub.f32 %v63, %v1800
    %v1802 = vand.u32 %v1801, 4294901760
    %1803 = vmatpush1.msra.mxu0 %v1802
    %1804 = vmatprep.subr.mxu0 0.0
    %v1805 = vand.u32 %v64, 4294901760
    %v1806 = vsub.f32 %v64, %v1805
    %v1807 = vand.u32 %v1806, 4294901760
    %1808 = vmatpush1.msra.mxu0 %v1807
    %1809 = vmatprep.subr.mxu0 0.0
    %v1810 = vand.u32 %v65, 4294901760
    %v1811 = vsub.f32 %v65, %v1810
    %v1812 = vand.u32 %v1811, 4294901760
    %1813 = vmatpush1.msra.mxu0 %v1812
    %1814 = vmatprep.subr.mxu0 0.0
    %v1815 = vand.u32 %v66, 4294901760
    %v1816 = vsub.f32 %v66, %v1815
    %v1817 = vand.u32 %v1816, 4294901760
    %1818 = vmatpush1.msra.mxu0 %v1817
    %1819 = vmatprep.subr.mxu0 0.0
    %v1820 = vand.u32 %v67, 4294901760
    %v1821 = vsub.f32 %v67, %v1820
    %v1822 = vand.u32 %v1821, 4294901760
    %1823 = vmatpush1.msra.mxu0 %v1822
    %1824 = vmatprep.subr.mxu0 0.0
    %v1825 = vand.u32 %v68, 4294901760
    %v1826 = vsub.f32 %v68, %v1825
    %v1827 = vand.u32 %v1826, 4294901760
    %1828 = vmatpush1.msra.mxu0 %v1827
    %1829 = vmatprep.subr.mxu0 0.0
    %v1830 = vand.u32 %v69, 4294901760
    %v1831 = vsub.f32 %v69, %v1830
    %v1832 = vand.u32 %v1831, 4294901760
    %1833 = vmatpush1.msra.mxu0 %v1832
    %1834 = vmatprep.subr.mxu0 0.0
    %v1835 = vand.u32 %v70, 4294901760
    %v1836 = vsub.f32 %v70, %v1835
    %v1837 = vand.u32 %v1836, 4294901760
    %1838 = vmatpush1.msra.mxu0 %v1837
    %1839 = vmatprep.subr.mxu0 0.0
    %v1840 = vand.u32 %v71, 4294901760
    %v1841 = vsub.f32 %v71, %v1840
    %v1842 = vand.u32 %v1841, 4294901760
    %1843 = vmatpush1.msra.mxu0 %v1842
    %1844 = vmatprep.subr.mxu0 0.0
    %v1845 = vand.u32 %v72, 4294901760
    %v1846 = vsub.f32 %v72, %v1845
    %v1847 = vand.u32 %v1846, 4294901760
    %1848 = vmatpush1.msra.mxu0 %v1847
    %1849 = vmatprep.subr.mxu0 0.0
    %v1850 = vand.u32 %v73, 4294901760
    %v1851 = vsub.f32 %v73, %v1850
    %v1852 = vand.u32 %v1851, 4294901760
    %1853 = vmatpush1.msra.mxu0 %v1852
    %1854 = vmatprep.subr.mxu0 0.0
    %v1855 = vand.u32 %v74, 4294901760
    %v1856 = vsub.f32 %v74, %v1855
    %v1857 = vand.u32 %v1856, 4294901760
    %1858 = vmatpush1.msra.mxu0 %v1857
    %1859 = vmatprep.subr.mxu0 0.0
    %v1860 = vand.u32 %v75, 4294901760
    %v1861 = vsub.f32 %v75, %v1860
    %v1862 = vand.u32 %v1861, 4294901760
    %1863 = vmatpush1.msra.mxu0 %v1862
    %1864 = vmatprep.subr.mxu0 0.0
    %v1865 = vand.u32 %v76, 4294901760
    %v1866 = vsub.f32 %v76, %v1865
    %v1867 = vand.u32 %v1866, 4294901760
    %1868 = vmatpush1.msra.mxu0 %v1867
    %1869 = vmatprep.subr.mxu0 0.0
    %v1870 = vand.u32 %v77, 4294901760
    %v1871 = vsub.f32 %v77, %v1870
    %v1872 = vand.u32 %v1871, 4294901760
    %1873 = vmatpush1.msra.mxu0 %v1872
    %1874 = vmatprep.subr.mxu0 0.0
    %v1875 = vand.u32 %v78, 4294901760
    %v1876 = vsub.f32 %v78, %v1875
    %v1877 = vand.u32 %v1876, 4294901760
    %1878 = vmatpush1.msra.mxu0 %v1877
    %1879 = vmatprep.subr.mxu0 0.0
    %1880 = vmatpush1.msra.mxu0 0.0
    %1881 = vmatprep.subr.mxu0 0.0
    %1882 = vmatpush1.msra.mxu0 0.0
    %1883 = vmatprep.subr.mxu0 0.0
    %1884 = vmatpush1.msra.mxu0 0.0
    %1885 = vmatprep.subr.mxu0 0.0
    %1886 = vmatpush1.msra.mxu0 0.0
    %1887 = vmatprep.subr.mxu0 0.0
    %1888 = vmatpush1.msra.mxu0 0.0
    %1889 = vmatprep.subr.mxu0 0.0
    %1890 = vmatpush1.msra.mxu0 0.0
    %1891 = vmatprep.subr.mxu0 0.0
    %1892 = vmatpush1.msra.mxu0 0.0
    %1893 = vmatprep.subr.mxu0 0.0
    %1894 = vmatpush1.msra.mxu0 0.0
    %1895 = vmatprep.subr.mxu0 0.0
    %1896 = vmatpush1.msra.mxu0 0.0
    %1897 = vmatprep.subr.mxu0 0.0
    %1898 = vmatpush1.msra.mxu0 0.0
    %1899 = vmatprep.subr.mxu0 0.0
    %1900 = vmatpush1.msra.mxu0 0.0
    %1901 = vmatprep.subr.mxu0 0.0
    %1902 = vmatpush1.msra.mxu0 0.0
    %1903 = vmatprep.subr.mxu0 0.0
    %1904 = vmatpush1.msra.mxu0 0.0
    %1905 = vmatprep.subr.mxu0 0.0
    %1906 = vmatpush1.msra.mxu0 0.0
    %1907 = vmatprep.subr.mxu0 0.0
    %1908 = vmatpush1.msra.mxu0 0.0
    %1909 = vmatprep.subr.mxu0 0.0
    %1910 = vmatpush1.msra.mxu0 0.0
    %1911 = vmatprep.mubr.f32.mxu0 0.0
    %v1912 = vand.u32 %v1363, 4294901760
    %1913 = vmatmul.mubr.f32.gmra.mrb[0].mxu0 %v1912
    %v1914 = vpop.f32.mrb[0].mxu0
    %v1915 = vadd.f32 %v1796, %v1914
    %v1916 = vpop.f32.mrb[0].mxu0
    %1917 = vdwg.mxu0
    %1918 = vmatprep.subr.mxu0 0.0
    %v1919 = vand.u32 %v63, 4294901760
    %1920 = vmatpush1.msra.mxu0 %v1919
    %1921 = vmatprep.subr.mxu0 0.0
    %v1922 = vand.u32 %v64, 4294901760
    %1923 = vmatpush1.msra.mxu0 %v1922
    %1924 = vmatprep.subr.mxu0 0.0
    %v1925 = vand.u32 %v65, 4294901760
    %1926 = vmatpush1.msra.mxu0 %v1925
    %1927 = vmatprep.subr.mxu0 0.0
    %v1928 = vand.u32 %v66, 4294901760
    %1929 = vmatpush1.msra.mxu0 %v1928
    %1930 = vmatprep.subr.mxu0 0.0
    %v1931 = vand.u32 %v67, 4294901760
    %1932 = vmatpush1.msra.mxu0 %v1931
    %1933 = vmatprep.subr.mxu0 0.0
    %v1934 = vand.u32 %v68, 4294901760
    %1935 = vmatpush1.msra.mxu0 %v1934
    %1936 = vmatprep.subr.mxu0 0.0
    %v1937 = vand.u32 %v69, 4294901760
    %1938 = vmatpush1.msra.mxu0 %v1937
    %1939 = vmatprep.subr.mxu0 0.0
    %v1940 = vand.u32 %v70, 4294901760
    %1941 = vmatpush1.msra.mxu0 %v1940
    %1942 = vmatprep.subr.mxu0 0.0
    %v1943 = vand.u32 %v71, 4294901760
    %1944 = vmatpush1.msra.mxu0 %v1943
    %1945 = vmatprep.subr.mxu0 0.0
    %v1946 = vand.u32 %v72, 4294901760
    %1947 = vmatpush1.msra.mxu0 %v1946
    %1948 = vmatprep.subr.mxu0 0.0
    %v1949 = vand.u32 %v73, 4294901760
    %1950 = vmatpush1.msra.mxu0 %v1949
    %1951 = vmatprep.subr.mxu0 0.0
    %v1952 = vand.u32 %v74, 4294901760
    %1953 = vmatpush1.msra.mxu0 %v1952
    %1954 = vmatprep.subr.mxu0 0.0
    %v1955 = vand.u32 %v75, 4294901760
    %1956 = vmatpush1.msra.mxu0 %v1955
    %1957 = vmatprep.subr.mxu0 0.0
    %v1958 = vand.u32 %v76, 4294901760
    %1959 = vmatpush1.msra.mxu0 %v1958
    %1960 = vmatprep.subr.mxu0 0.0
    %v1961 = vand.u32 %v77, 4294901760
    %1962 = vmatpush1.msra.mxu0 %v1961
    %1963 = vmatprep.subr.mxu0 0.0
    %v1964 = vand.u32 %v78, 4294901760
    %1965 = vmatpush1.msra.mxu0 %v1964
    %1966 = vmatprep.subr.mxu0 0.0
    %1967 = vmatpush1.msra.mxu0 0.0
    %1968 = vmatprep.subr.mxu0 0.0
    %1969 = vmatpush1.msra.mxu0 0.0
    %1970 = vmatprep.subr.mxu0 0.0
    %1971 = vmatpush1.msra.mxu0 0.0
    %1972 = vmatprep.subr.mxu0 0.0
    %1973 = vmatpush1.msra.mxu0 0.0
    %1974 = vmatprep.subr.mxu0 0.0
    %1975 = vmatpush1.msra.mxu0 0.0
    %1976 = vmatprep.subr.mxu0 0.0
    %1977 = vmatpush1.msra.mxu0 0.0
    %1978 = vmatprep.subr.mxu0 0.0
    %1979 = vmatpush1.msra.mxu0 0.0
    %1980 = vmatprep.subr.mxu0 0.0
    %1981 = vmatpush1.msra.mxu0 0.0
    %1982 = vmatprep.subr.mxu0 0.0
    %1983 = vmatpush1.msra.mxu0 0.0
    %1984 = vmatprep.subr.mxu0 0.0
    %1985 = vmatpush1.msra.mxu0 0.0
    %1986 = vmatprep.subr.mxu0 0.0
    %1987 = vmatpush1.msra.mxu0 0.0
    %1988 = vmatprep.subr.mxu0 0.0
    %1989 = vmatpush1.msra.mxu0 0.0
    %1990 = vmatprep.subr.mxu0 0.0
    %1991 = vmatpush1.msra.mxu0 0.0
    %1992 = vmatprep.subr.mxu0 0.0
    %1993 = vmatpush1.msra.mxu0 0.0
    %1994 = vmatprep.subr.mxu0 0.0
    %1995 = vmatpush1.msra.mxu0 0.0
    %1996 = vmatprep.subr.mxu0 0.0
    %1997 = vmatpush1.msra.mxu0 0.0
    %1998 = vmatprep.mubr.f32.mxu0 0.0
    %v1999 = vand.u32 %v1363, 4294901760
    %2000 = vmatmul.mubr.f32.gmra.mrb[0].mxu0 %v1999
    %v2001 = vpop.f32.mrb[0].mxu0
    %v2002 = vadd.f32 %v1915, %v2001
    %v2003 = vpop.f32.mrb[0].mxu0
    %2004 = vdwg.mxu0
    %v2005 = vmax.f32 %v1360, 1e-16
    %v2006 = vmax.f32 %v2002, 1e-16
    %v2007 = vmul.f32 %v2005, %v2006
    %v2008 = vmul.f32 %v718, %v718
    %v2009 = vrcp.pop %v2007
    %v2010 = vmul.f32 %v2008, %v2009
    %v2011 = vsub.f32 %v2010, 1e-05
    %v2012 = vmax.f32 %v2011, 0.0
    %s2013 = sadd.s32 0, 0
    %s2014 = smul.u32 %s2013, 8
    %s2015 = sadd.s32 %s2014, 8
    %p2016 = scmp.gt.s32.totalorder %s2015, 4
    %p2017 = scmp.le.s32.totalorder %s2015, 4
    // Predicated region
    $region30: #{tpu_custom_call.1} parent=1 // pred_check
      %p2018 = pneg %p2017
    $region31: #{tpu_custom_call.1} parent=1 // pred_check_branch
      %2020 = sbr.rel (%p2018) target = $region33
    $region32: #{tpu_custom_call.1} parent=1 // pred_region
      %v2021 = vld [vmem:[#allocation2] sm:$0xff]
      %v2022 = vadd.f32 %v2012, 0.0
      %v2023 = vadd.f32 %v2021, %v2022
      %2024 = vst [vmem:[#allocation2] sm:$0xff] %v2023
    $region33: #{tpu_custom_call.1} parent=1 // pred_fallthru
      _
    // Predicated region
    $region34: #{tpu_custom_call.1} parent=1 // pred_check
      %p2025 = pneg %p2016
    $region35: #{tpu_custom_call.1} parent=1 // pred_check_branch
      %2027 = sbr.rel (%p2025) target = $region37
    $region36: #{tpu_custom_call.1} parent=1 // pred_region
      %v2028 = vlaneseq
      %v2029 = vshrl.u32 %v2028, 7
      %v2030 = vstv %s2014
      %v2031 = vadd.s32 %v2030, %v2029
      %vm2032 = vcmp.lt.s32.totalorder %v2031, 4
      %v2033 = vsel %vm2032, %v2012, 0.0
      %v2034 = vld [vmem:[#allocation2] sm:$0xff]
      %v2035 = vadd.f32 %v2033, 0.0
      %v2036 = vadd.f32 %v2034, %v2035
      %2037 = vst [vmem:[#allocation2] sm:$0xff] %v2036
    $region37: #{tpu_custom_call.1} parent=1 // pred_fallthru
      _
    // Predicated region
    $region38: #{tpu_custom_call.1} parent=1 // pred_check
      %p2038 = pneg %p56
    $region39: #{tpu_custom_call.1} parent=1 // pred_check_branch
      %2040 = sbr.rel (%p2038) target = $region41
    $region40: #{tpu_custom_call.1} parent=1 // pred_region
      %v2041 = vld [vmem:[#allocation2] sm:$0xff]
      %2042 = vst [vmem:[#allocation9] sm:$0xff] %v2041
    $region41: #{tpu_custom_call.1} parent=1 // pred_fallthru
      _
    // Predicated region
    $region42: #{tpu_custom_call.1} parent=1 // pred_check
      _
    $region43: #{tpu_custom_call.1} parent=1 // pred_check_branch
      %2044 = sbr.rel (0) target = $region45
    $region44: #{tpu_custom_call.1} parent=1 // pred_region
      %s2046 = ssub.s32 128, 128
      %2047 = vsyncadd [#allocation5], %s2046
      %s2049 = sshll.u32 [#allocation9], 4
      %s2050 = int_to_ptr.vmem [resolvable:$true] %s2049
      %2052 = dma.vmem_to_hbm [thread:$0]  %s2050, 128, %s3, [#allocation5]
    $region45: #{tpu_custom_call.1} parent=1 // pred_fallthru
      _
    // Predicated region
    $region46: #{tpu_custom_call.1} parent=1 // pred_check
      _
    $region47: #{tpu_custom_call.1} parent=1 // pred_check_branch
      %2054 = sbr.rel (0) target = $region49
    $region48: #{tpu_custom_call.1} parent=1 // pred_region
      %2055 = dma.done [#allocation5], 128
    $region49: #{tpu_custom_call.1} parent=1 // pred_fallthru
      _
    %2056 = vsyncpa [#allocation4], 1
    %2057 = vsyncpa [#allocation7], 1
    %2058 = vsyncpa [#allocation5], 1

</llo_original>
